<compile_context>
chip_gen: v5e
topology: v5e:2x2
jax: 0.10.0
libtpu: 0.0.40
codegen_flags: <defaults>
</compile_context>

<pallas_src>
import functools

import numpy as np
import jax
import jax.numpy as jnp
from jax.experimental import pallas as pl
from jax.experimental.pallas import tpu as pltpu


def _round_up(x, m):
    return ((x + m - 1) // m) * m


# ---------------------------------------------------------------------------
# Path A: small vocabulary.  One packed one-hot selection matmul per tile.
# ---------------------------------------------------------------------------
def _select_packed_kernel(idx_ref, w_ref, o_ref, *, p_pack, width):
    """idx_ref: (TBP, P) int32, token ids pre-shifted by p*nep per packing slot.
       w_ref  : (P*nep, P*emb) f32 block-diagonal table (VMEM resident).
       o_ref  : (TBP, P*emb)   lane-dense packed output rows."""
    tbp = o_ref.shape[0]
    idx = idx_ref[...]                                              # (TBP, P)
    iota = jax.lax.broadcasted_iota(jnp.int32, (tbp, width), 1)
    hit = iota == idx[:, 0:1]
    for p in range(1, p_pack):
        hit = jnp.logical_or(hit, iota == idx[:, p:p + 1])
    onehot = hit.astype(jnp.float32)                                # (TBP, P*nep)
    # HIGHEST keeps the selected rows exact w.r.t. the f32 table (DEFAULT may
    # round W through bf16 MXU passes); MXU cost is negligible at these sizes.
    o_ref[...] = jnp.dot(onehot, w_ref[...],
                         preferred_element_type=jnp.float32,
                         precision=jax.lax.Precision.HIGHEST).astype(o_ref.dtype)


def _dense_w_forward(indices, w, *, tile_b, out_dtype):
    num_emb, emb = w.shape
    f32 = jnp.float32

    if emb < 128 and 128 % emb == 0:
        p_pack = 128 // emb           # tokens packed per lane-dense output row
    else:
        p_pack = 1                    # TODO(synk): pad emb to a 128 multiple
    nep = _round_up(num_emb, 128)
    width = p_pack * nep

    # Block-diagonal packed table: Wblk[p*nep + i, p*emb + j] = W[i, j].
    w_pad = jnp.pad(w.astype(f32), ((0, nep - num_emb), (0, 0)))
    w_blk = jnp.kron(jnp.eye(p_pack, dtype=f32), w_pad)            # (P*nep, P*emb)

    flat = indices.reshape(-1).astype(jnp.int32)
    b = flat.shape[0]

    unit = 8 * p_pack                                  # keep TBP a multiple of 8
    tile_b = max(unit, (min(tile_b, _round_up(b, unit)) // unit) * unit)
    b_pad = _round_up(b, tile_b)
    flat = jnp.pad(flat, (0, b_pad - b))               # pad tokens -> id 0 (discarded)

    # Token t -> packed row t // P, slot t % P; shift slot p into segment p.
    shifts = (jnp.arange(p_pack, dtype=jnp.int32) * nep)[None, :]
    idx2d = flat.reshape(b_pad // p_pack, p_pack) + shifts          # (b_pad/P, P)

    tbp = tile_b // p_pack
    out = pl.pallas_call(
        functools.partial(_select_packed_kernel, p_pack=p_pack, width=width),
        out_shape=jax.ShapeDtypeStruct((b_pad // p_pack, p_pack * emb), out_dtype),
        grid=(b_pad // tile_b,),
        in_specs=[
            pl.BlockSpec((tbp, p_pack), lambda i: (i, 0)),                    # indices
            pl.BlockSpec((p_pack * nep, p_pack * emb), lambda i: (0, 0)),     # W (resident)
        ],
        out_specs=pl.BlockSpec((tbp, p_pack * emb), lambda i: (i, 0)),
        compiler_params=pltpu.CompilerParams(
            dimension_semantics=("parallel",),
            vmem_limit_bytes=32 * 1024 * 1024),
    )(idx2d, w_blk)

    # (b_pad/P, P*emb) -> (b_pad, emb) is a free C-order reshape on HBM data.
    return out.reshape(b_pad, emb)[:b].reshape(*indices.shape, emb)


# ---------------------------------------------------------------------------
# Path B (fallback): large vocabulary, W never materialized.  G2xG3 are
# pre-contracted into H, G1 expanded into M; the kernel does an in-VMEM
# one-hot gather of H rows, one rank-contraction matmul and an n1-way select.
# ---------------------------------------------------------------------------
def _blocktt_embed_kernel(ix_ref, h_ref, m_ref, o_ref, *, n1, n23, emb):
    """ix_ref: (TB, 2) int32  [:,0]=i1, [:,1]=i2*n3+i3  (single merged input)
       h_ref : (n23, r1*m2*m3)      f32  pre-contracted G2xG3 (VMEM resident)
       m_ref : (r1*m2*m3, n1*emb)   f32  expanded G1        (VMEM resident)
       o_ref : (TB, emb)"""
    tb = o_ref.shape[0]
    hi = jax.lax.Precision.HIGHEST
    ix = ix_ref[...]
    i1, i23 = ix[:, 0:1], ix[:, 1:2]

    onehot = (jax.lax.broadcasted_iota(jnp.int32, (tb, n23), 1)
              == i23).astype(jnp.float32)                              # (TB, n23)
    hg = jnp.dot(onehot, h_ref[...],
                 preferred_element_type=jnp.float32, precision=hi)     # (TB, r1*m23)
    p = jnp.dot(hg, m_ref[...],
                preferred_element_type=jnp.float32, precision=hi)      # (TB, n1*emb)

    acc = jnp.zeros((tb, emb), jnp.float32)
    for v in range(n1):                                                # n1 tiny
        sel = (i1 == v).astype(jnp.float32)
        acc = acc + sel * p[:, v * emb:(v + 1) * emb]
    o_ref[...] = acc.astype(o_ref.dtype)


def _blocktt_factorized_forward(indices, factors, *, tile_b, out_dtype):
    g1, g2, g3 = factors
    _, n1, m1, r1 = g1.shape
    _, n2, m2, _ = g2.shape
    _, n3, m3, _ = g3.shape
    m23, n23 = m2 * m3, n2 * n3
    emb = m1 * m23
    f32 = jnp.float32
    hi = jax.lax.Precision.HIGHEST

    # H[i2*n3+i3, a*m23 + j2*m3 + j3] = sum_b G2[a,i2,j2,b] * G3[b,i3,j3,0]
    h = jnp.einsum('aykb,bzl->yzakl', g2.astype(f32), g3[..., 0].astype(f32),
                   precision=hi).reshape(n23, r1 * m23)
    # M[a*m23 + k, v*emb + j1*m23 + l] = G1[0,v,j1,a] * delta(k, l)
    # TODO(synk): keep this factorized for very large rank/emb (m23x zeros,
    #             pinned VMEM resident -> v7x VMEM cliff).
    m_mat = jnp.einsum('vja,kl->akvjl', g1[0].astype(f32),
                       jnp.eye(m23, dtype=f32),
                       precision=hi).reshape(r1 * m23, n1 * emb)

    flat = indices.reshape(-1).astype(jnp.int32)
    b = flat.shape[0]
    ix = jnp.stack([flat // n23, flat % n23], axis=-1)     # (b, 2) merged index

    tile_b = max(8, (min(tile_b, _round_up(b, 8)) // 8) * 8)
    b_pad = _round_up(b, tile_b)
    if b_pad != b:
        ix = jnp.pad(ix, ((0, b_pad - b), (0, 0)))

    out = pl.pallas_call(
        functools.partial(_blocktt_embed_kernel, n1=n1, n23=n23, emb=emb),
        out_shape=jax.ShapeDtypeStruct((b_pad, emb), out_dtype),
        grid=(b_pad // tile_b,),
        in_specs=[
            pl.BlockSpec((tile_b, 2), lambda i: (i, 0)),            # merged indices
            pl.BlockSpec((n23, r1 * m23), lambda i: (0, 0)),        # H (resident)
            pl.BlockSpec((r1 * m23, n1 * emb), lambda i: (0, 0)),   # M (resident)
        ],
        # TODO(synk): pack tokens per output row (as in the dense-W path) to
        #             make these stores lane-dense when emb < 128.
        out_specs=pl.BlockSpec((tile_b, emb), lambda i: (i, 0)),
        compiler_params=pltpu.CompilerParams(
            dimension_semantics=("parallel",),
            vmem_limit_bytes=32 * 1024 * 1024),
    )(ix, h, m_mat)

    return out[:b].reshape(*indices.shape, emb)


# ---------------------------------------------------------------------------
# Public entry point: FactorizedEmbedding.forward (blocktt, n_layers=1).
# ---------------------------------------------------------------------------
def factorized_embedding_forward(indices, factors, *, tile_b=2048,
                                 out_dtype=jnp.float32):
    """Equivalent of FactorizedEmbedding.forward(input).

    tile_b: tokens per grid step.  2048 is a good default for v5e/v6e (128 MiB
    VMEM) and still within the v7x (64 MiB) budget; sweep 1024-4096 per chip.
    out_dtype: set jnp.bfloat16 to halve output HBM writeback if acceptable.
    """
    g1, g2, g3 = factors
    r0, n1, m1, _ = g1.shape
    _, n2, m2, _ = g2.shape
    _, n3, m3, r3 = g3.shape
    assert r0 == 1 and r3 == 1, "boundary TT ranks must be 1"
    num_emb = n1 * n2 * n3
    emb = m1 * m2 * m3

    p_pack = 128 // emb if (emb < 128 and 128 % emb == 0) else 1
    nep = _round_up(num_emb, 128)
    table_bytes = (p_pack * nep) * (p_pack * emb) * 4
    if nep <= 2048 and table_bytes <= (4 << 20):
        # Small vocab: reconstruct the full table once (weights-only, tiny)
        # and run the single-matmul selection kernel.
        f32 = jnp.float32
        w = jnp.einsum('xja,aykb,bzl->xyzjkl', g1[0].astype(f32),
                       g2.astype(f32), g3[..., 0].astype(f32),
                       precision=jax.lax.Precision.HIGHEST
                       ).reshape(num_emb, emb)
        return _dense_w_forward(indices, w, tile_b=tile_b, out_dtype=out_dtype)
    return _blocktt_factorized_forward(indices, (g1, g2, g3),
                                       tile_b=tile_b, out_dtype=out_dtype)


if __name__ == "__main__":
    # Module config: num_embeddings = 5*5*5 = 125, embedding_dim = 4*4*2 = 32,
    # d = 3, factorization = 'blocktt', rank = 8  ->  TT ranks (1, 8, 8, 1).
    num_embeddings, embedding_dim = 125, 32
    n_shape, m_shape, rank = (5, 5, 5), (4, 4, 2), 8
    ranks = (1, rank, rank, 1)

    key = jax.random.PRNGKey(0)
    k1, k2, k3, kidx = jax.random.split(key, 4)

    # Deterministic synthetic init (same spirit as reset_parameters(): target
    # std of the reconstructed table ~ 1/sqrt(3*num_embeddings)).
    # TODO(synk): exact tltorch tensor_init variance split is not replicated.
    target_std = 1.0 / np.sqrt(3 * num_embeddings)
    factor_std = float((target_std / np.sqrt(float(rank * rank))) ** (1.0 / 3.0))
    g1 = jax.random.normal(k1, (ranks[0], n_shape[0], m_shape[0], ranks[1]),
                           jnp.float32) * factor_std
    g2 = jax.random.normal(k2, (ranks[1], n_shape[1], m_shape[1], ranks[2]),
                           jnp.float32) * factor_std
    g3 = jax.random.normal(k3, (ranks[2], n_shape[2], m_shape[2], ranks[3]),
                           jnp.float32) * factor_std

    # Example input: integer token ids of shape (batch=2, seq=8).
    indices = jax.random.randint(kidx, (2, 8), 0, num_embeddings, dtype=jnp.int32)

    out = factorized_embedding_forward(indices, (g1, g2, g3))
    out = jax.block_until_ready(out)

    # Host-side float64 reference: materialize W from the TT cores, gather rows.
    g1n, g2n, g3n = (np.asarray(t, dtype=np.float64) for t in (g1, g2, g3))
    full = np.einsum('xja,aykb,bzl->xyzjkl', g1n[0], g2n, g3n[..., 0])
    w_ref = full.reshape(num_embeddings, embedding_dim)
    ref = w_ref[np.asarray(indices).reshape(-1)].reshape(*indices.shape,
                                                         embedding_dim)

    assert out.shape == (*indices.shape, embedding_dim)
    np.testing.assert_allclose(np.asarray(out, dtype=np.float64), ref,
                               rtol=5e-4, atol=1e-5)
    print("KERNEL_OK")
</pallas_src>

<mosaic_0001>
module attributes {stable_mosaic.version = 11 : i64} {
  func.func @_select_packed_kernel(%arg0: i32, %arg1: memref<8x4xi32, #tpu.memory_space<vmem>>, %arg2: memref<512x128xf32, #tpu.memory_space<vmem>>, %arg3: memref<8x128xf32, #tpu.memory_space<vmem>>) attributes {dimension_semantics = [#tpu.dimension_semantics<parallel>], iteration_bounds = array<i64: 1>, scalar_prefetch = 0 : i64, scratch_operands = 0 : i64, tpu.core_type = #tpu.core_type<tc>, window_params = [{transform_indices = @transform_0, window_bounds = array<i64: 8, 4>}, {pipeline_mode = #tpu.pipeline_mode<synchronous>, transform_indices = @transform_1, window_bounds = array<i64: 512, 128>}, {transform_indices = @transform_2, window_bounds = array<i64: 8, 128>}]} {
    %c0 = arith.constant 0 : index
    %c0_0 = arith.constant 0 : index
    %0 = vector.load %arg1[%c0, %c0_0] : memref<8x4xi32, #tpu.memory_space<vmem>>, vector<8x4xi32>
    %1 = tpu.iota {dimensions = array<i32: 1>} : vector<8x512xi32>
    %2 = vector.extract_strided_slice %0 {offsets = [0, 0], sizes = [8, 1], strides = [1, 1]} : vector<8x4xi32> to vector<8x1xi32>
    %3 = vector.broadcast %2 : vector<8x1xi32> to vector<8x512xi32>
    %4 = arith.cmpi eq, %1, %3 : vector<8x512xi32>
    %5 = vector.extract_strided_slice %0 {offsets = [0, 1], sizes = [8, 1], strides = [1, 1]} : vector<8x4xi32> to vector<8x1xi32>
    %6 = vector.broadcast %5 : vector<8x1xi32> to vector<8x512xi32>
    %7 = arith.cmpi eq, %1, %6 : vector<8x512xi32>
    %8 = arith.ori %4, %7 : vector<8x512xi1>
    %9 = vector.extract_strided_slice %0 {offsets = [0, 2], sizes = [8, 1], strides = [1, 1]} : vector<8x4xi32> to vector<8x1xi32>
    %10 = vector.broadcast %9 : vector<8x1xi32> to vector<8x512xi32>
    %11 = arith.cmpi eq, %1, %10 : vector<8x512xi32>
    %12 = arith.ori %8, %11 : vector<8x512xi1>
    %13 = vector.extract_strided_slice %0 {offsets = [0, 3], sizes = [8, 1], strides = [1, 1]} : vector<8x4xi32> to vector<8x1xi32>
    %14 = vector.broadcast %13 : vector<8x1xi32> to vector<8x512xi32>
    %15 = arith.cmpi eq, %1, %14 : vector<8x512xi32>
    %16 = arith.ori %12, %15 : vector<8x512xi1>
    %17 = arith.extui %16 : vector<8x512xi1> to vector<8x512xi32>
    %18 = arith.sitofp %17 : vector<8x512xi32> to vector<8x512xf32>
    %c0_1 = arith.constant 0 : index
    %c0_2 = arith.constant 0 : index
    %19 = vector.load %arg2[%c0_1, %c0_2] : memref<512x128xf32, #tpu.memory_space<vmem>>, vector<512x128xf32>
    %cst = arith.constant dense<0.000000e+00> : vector<8x128xf32>
    %20 = tpu.matmul %18, %19, %cst {dimension_numbers = #tpu.dot_dimension_numbers<[1], [0], [0], [1], [0, 0, 1, 1], [], []>, precision = #tpu.contract_precision<fp32>} : vector<8x512xf32>, vector<512x128xf32>, vector<8x128xf32> -> vector<8x128xf32>
    %c0_3 = arith.constant 0 : index
    %c0_4 = arith.constant 0 : index
    %21 = vector.load %arg3[%c0_3, %c0_4] : memref<8x128xf32, #tpu.memory_space<vmem>>, vector<8x128xf32>
    tpu.vector_store %arg3[%c0_3, %c0_4], %20 {strides = array<i32>} : memref<8x128xf32, #tpu.memory_space<vmem>>, vector<8x128xf32>,
    return
  }
  func.func @transform_0(%arg0: i32) -> (i32, i32) {
    %c0_i32 = arith.constant 0 : i32
    %c0_i32_0 = arith.constant 0 : i32
    return %arg0, %c0_i32 : i32, i32
  }
  func.func @transform_1(%arg0: i32) -> (i32, i32) {
    %c0_i32 = arith.constant 0 : i32
    %c0_i32_0 = arith.constant 0 : i32
    %c0_i32_1 = arith.constant 0 : i32
    return %c0_i32, %c0_i32_0 : i32, i32
  }
  func.func @transform_2(%arg0: i32) -> (i32, i32) {
    %c0_i32 = arith.constant 0 : i32
    %c0_i32_0 = arith.constant 0 : i32
    return %arg0, %c0_i32 : i32, i32
  }
}

</mosaic_0001>

<llo_original>
// kernel: tpu_custom_call.1
$region0: #{tpu_custom_call.1}
  #allocation0 [shape = 'u32[]', space=smem, size = 0x4, offset = 0x4, fixed_abs, tag = 'smem constant byte address 0x4 - core index']
  #allocation1 [shape = 'u32[72,128]{1,0:T(1,128)}', space=vmem, size = 0x9000, scoped, tag = 'internal scratch']
  %s0 = inlined_call_operand.vmem [shape: s32[8,4], index: 0, kind: input, shape index: {}]
  %s1 = inlined_call_operand.hbm [shape: f32[512,128], index: 1, kind: input, shape index: {}]
  %s2 = inlined_call_operand.hbm [shape: f32[8,128], index: 2, kind: output, shape index: {}]
  %s3 = sld [smem:[#allocation0]]
  $region22: #{tpu_custom_call.1} parent=0
    _
  %s5 = ssub.s32 1, %s3
  %s6 = scalar_select 0, %s5, %s3
  $region1: #{tpu_custom_call.1} parent=0
    #allocation2 [shape = 'u8[262144]{0}', space=vmem, size = 0x40000, scoped, tag = 'input window, operand 1, single buffered']
    #allocation3 [shape = 's32[1]{0}', space=sflag, size = 0x4, scoped, tag = 'scoped memory for tpu_custom_call.1']
    #allocation4 [shape = 's32[1]{0}', space=sflag, size = 0x4, scoped, tag = 'scoped memory for tpu_custom_call.1']
    #allocation5 [shape = 'u8[4096]{0}', space=vmem, size = 0x1000, scoped, tag = 'output window, operand 0, single buffered']
    %7 = vsyncpa [#allocation3], 0
    %8 = vsyncpa [#allocation4], 0
    // Predicated region
    $region2: #{tpu_custom_call.1} parent=1 // pred_check
      _
    $region3: #{tpu_custom_call.1} parent=1 // pred_check_branch
      %10 = sbr.rel (0) target = $region5
    $region4: #{tpu_custom_call.1} parent=1 // pred_region
      _
    $region5: #{tpu_custom_call.1} parent=1 // pred_fallthru
      _
    // Predicated region
    $region6: #{tpu_custom_call.1} parent=1 // pred_check
      _
    $region7: #{tpu_custom_call.1} parent=1 // pred_check_branch
      %12 = sbr.rel (0) target = $region9
    $region8: #{tpu_custom_call.1} parent=1 // pred_region
      %14 = vsyncadd [#allocation3], 0
      %s15 = sshll.u32 %s1, 4
      %s16 = int_to_ptr.hbm [resolvable:$true] %s15
      %s17 = sshll.u32 [#allocation2], 4
      %s18 = int_to_ptr.vmem [resolvable:$true] %s17
      %23 = dma.hbm_to_vmem [thread:$0]  %s16, 8192, %s18, [#allocation3], 128, 128, 8
    $region9: #{tpu_custom_call.1} parent=1 // pred_fallthru
      _
    // Predicated region
    $region10: #{tpu_custom_call.1} parent=1 // pred_check
      _
    $region11: #{tpu_custom_call.1} parent=1 // pred_check_branch
      %25 = sbr.rel (0) target = $region13
    $region12: #{tpu_custom_call.1} parent=1 // pred_region
      %27 = dma.done [#allocation3], 8192
    $region13: #{tpu_custom_call.1} parent=1 // pred_fallthru
      _
    %v28 = vld [vmem:[%s0] sm:$0xff]
    %v29 = vlaneseq
    %v30 = vand.u32 %v29, 127
    %v31 = vadd.s32 %v30, 128
    %v32 = vadd.s32 %v30, 256
    %v33 = vadd.s32 %v30, 384
    %34 = vset.pattern.permute.xlu0 0
    %35 = vperm.xlu0 %34, %v28
    %v36 = vpop.permute.xlu0 %35
    %vm37 = vcmp.eq.s32.totalorder %v30, %v36
    %vm38 = vcmp.eq.s32.totalorder %v31, %v36
    %vm39 = vcmp.eq.s32.totalorder %v32, %v36
    %vm40 = vcmp.eq.s32.totalorder %v33, %v36
    %41 = vset.pattern.permute.xlu0 1
    %42 = vperm.xlu0 %41, %v28
    %v43 = vpop.permute.xlu0 %42
    %vm44 = vcmp.eq.s32.totalorder %v30, %v43
    %vm45 = vcmp.eq.s32.totalorder %v31, %v43
    %vm46 = vcmp.eq.s32.totalorder %v32, %v43
    %vm47 = vcmp.eq.s32.totalorder %v33, %v43
    %vm48 = vmor %vm37, %vm44
    %vm49 = vmor %vm38, %vm45
    %vm50 = vmor %vm39, %vm46
    %vm51 = vmor %vm40, %vm47
    %52 = vset.pattern.permute.xlu0 2
    %53 = vperm.xlu0 %52, %v28
    %v54 = vpop.permute.xlu0 %53
    %vm55 = vcmp.eq.s32.totalorder %v30, %v54
    %vm56 = vcmp.eq.s32.totalorder %v31, %v54
    %vm57 = vcmp.eq.s32.totalorder %v32, %v54
    %vm58 = vcmp.eq.s32.totalorder %v33, %v54
    %vm59 = vmor %vm48, %vm55
    %vm60 = vmor %vm49, %vm56
    %vm61 = vmor %vm50, %vm57
    %vm62 = vmor %vm51, %vm58
    %63 = vset.pattern.permute.xlu0 3
    %64 = vperm.xlu0 %63, %v28
    %v65 = vpop.permute.xlu0 %64
    %vm66 = vcmp.eq.s32.totalorder %v30, %v65
    %vm67 = vcmp.eq.s32.totalorder %v31, %v65
    %vm68 = vcmp.eq.s32.totalorder %v32, %v65
    %vm69 = vcmp.eq.s32.totalorder %v33, %v65
    %vm70 = vmor %vm59, %vm66
    %vm71 = vmor %vm60, %vm67
    %vm72 = vmor %vm61, %vm68
    %vm73 = vmor %vm62, %vm69
    %v74 = vsel %vm70, 1, 0
    %v75 = vsel %vm71, 1, 0
    %v76 = vsel %vm72, 1, 0
    %v77 = vsel %vm73, 1, 0
    %v78 = vcvt.s32.f32 %v74
    %v79 = vcvt.s32.f32 %v75
    %v80 = vcvt.s32.f32 %v76
    %v81 = vcvt.s32.f32 %v77
    %v82 = vld [vmem:[#allocation2] sm:$0xff]
    %v83 = vld [vmem:[#allocation2 + $0x8] sm:$0xff]
    %v84 = vld [vmem:[#allocation2 + $0x10] sm:$0xff]
    %v85 = vld [vmem:[#allocation2 + $0x18] sm:$0xff]
    %v86 = vld [vmem:[#allocation2 + $0x20] sm:$0xff]
    %v87 = vld [vmem:[#allocation2 + $0x28] sm:$0xff]
    %v88 = vld [vmem:[#allocation2 + $0x30] sm:$0xff]
    %v89 = vld [vmem:[#allocation2 + $0x38] sm:$0xff]
    %v90 = vld [vmem:[#allocation2 + $0x40] sm:$0xff]
    %v91 = vld [vmem:[#allocation2 + $0x48] sm:$0xff]
    %v92 = vld [vmem:[#allocation2 + $0x50] sm:$0xff]
    %v93 = vld [vmem:[#allocation2 + $0x58] sm:$0xff]
    %v94 = vld [vmem:[#allocation2 + $0x60] sm:$0xff]
    %v95 = vld [vmem:[#allocation2 + $0x68] sm:$0xff]
    %v96 = vld [vmem:[#allocation2 + $0x70] sm:$0xff]
    %v97 = vld [vmem:[#allocation2 + $0x78] sm:$0xff]
    %v98 = vld [vmem:[#allocation2 + $0x80] sm:$0xff]
    %v99 = vld [vmem:[#allocation2 + $0x88] sm:$0xff]
    %v100 = vld [vmem:[#allocation2 + $0x90] sm:$0xff]
    %v101 = vld [vmem:[#allocation2 + $0x98] sm:$0xff]
    %v102 = vld [vmem:[#allocation2 + $0xa0] sm:$0xff]
    %v103 = vld [vmem:[#allocation2 + $0xa8] sm:$0xff]
    %v104 = vld [vmem:[#allocation2 + $0xb0] sm:$0xff]
    %v105 = vld [vmem:[#allocation2 + $0xb8] sm:$0xff]
    %v106 = vld [vmem:[#allocation2 + $0xc0] sm:$0xff]
    %v107 = vld [vmem:[#allocation2 + $0xc8] sm:$0xff]
    %v108 = vld [vmem:[#allocation2 + $0xd0] sm:$0xff]
    %v109 = vld [vmem:[#allocation2 + $0xd8] sm:$0xff]
    %v110 = vld [vmem:[#allocation2 + $0xe0] sm:$0xff]
    %v111 = vld [vmem:[#allocation2 + $0xe8] sm:$0xff]
    %v112 = vld [vmem:[#allocation2 + $0xf0] sm:$0xff]
    %v113 = vld [vmem:[#allocation2 + $0xf8] sm:$0xff]
    %v114 = vld [vmem:[#allocation2 + $0x100] sm:$0xff]
    %v115 = vld [vmem:[#allocation2 + $0x108] sm:$0xff]
    %v116 = vld [vmem:[#allocation2 + $0x110] sm:$0xff]
    %v117 = vld [vmem:[#allocation2 + $0x118] sm:$0xff]
    %v118 = vld [vmem:[#allocation2 + $0x120] sm:$0xff]
    %v119 = vld [vmem:[#allocation2 + $0x128] sm:$0xff]
    %v120 = vld [vmem:[#allocation2 + $0x130] sm:$0xff]
    %v121 = vld [vmem:[#allocation2 + $0x138] sm:$0xff]
    %v122 = vld [vmem:[#allocation2 + $0x140] sm:$0xff]
    %v123 = vld [vmem:[#allocation2 + $0x148] sm:$0xff]
    %v124 = vld [vmem:[#allocation2 + $0x150] sm:$0xff]
    %v125 = vld [vmem:[#allocation2 + $0x158] sm:$0xff]
    %v126 = vld [vmem:[#allocation2 + $0x160] sm:$0xff]
    %v127 = vld [vmem:[#allocation2 + $0x168] sm:$0xff]
    %v128 = vld [vmem:[#allocation2 + $0x170] sm:$0xff]
    %v129 = vld [vmem:[#allocation2 + $0x178] sm:$0xff]
    %v130 = vld [vmem:[#allocation2 + $0x180] sm:$0xff]
    %v131 = vld [vmem:[#allocation2 + $0x188] sm:$0xff]
    %v132 = vld [vmem:[#allocation2 + $0x190] sm:$0xff]
    %v133 = vld [vmem:[#allocation2 + $0x198] sm:$0xff]
    %v134 = vld [vmem:[#allocation2 + $0x1a0] sm:$0xff]
    %v135 = vld [vmem:[#allocation2 + $0x1a8] sm:$0xff]
    %v136 = vld [vmem:[#allocation2 + $0x1b0] sm:$0xff]
    %v137 = vld [vmem:[#allocation2 + $0x1b8] sm:$0xff]
    %v138 = vld [vmem:[#allocation2 + $0x1c0] sm:$0xff]
    %v139 = vld [vmem:[#allocation2 + $0x1c8] sm:$0xff]
    %v140 = vld [vmem:[#allocation2 + $0x1d0] sm:$0xff]
    %v141 = vld [vmem:[#allocation2 + $0x1d8] sm:$0xff]
    %v142 = vld [vmem:[#allocation2 + $0x1e0] sm:$0xff]
    %v143 = vld [vmem:[#allocation2 + $0x1e8] sm:$0xff]
    %v144 = vld [vmem:[#allocation2 + $0x1f0] sm:$0xff]
    %v145 = vld [vmem:[#allocation2 + $0x1f8] sm:$0xff]
    %v146 = vand.u32 %v97, 4294901760
    %147 = vmatpush.msra.mxu0 %v146
    %v148 = vand.u32 %v96, 4294901760
    %149 = vmatpush.msra.mxu0 %v148
    %v150 = vand.u32 %v95, 4294901760
    %151 = vmatpush.msra.mxu0 %v150
    %v152 = vand.u32 %v94, 4294901760
    %153 = vmatpush.msra.mxu0 %v152
    %v154 = vand.u32 %v93, 4294901760
    %155 = vmatpush.msra.mxu0 %v154
    %v156 = vand.u32 %v92, 4294901760
    %157 = vmatpush.msra.mxu0 %v156
    %v158 = vand.u32 %v91, 4294901760
    %159 = vmatpush.msra.mxu0 %v158
    %v160 = vand.u32 %v90, 4294901760
    %161 = vmatpush.msra.mxu0 %v160
    %v162 = vand.u32 %v89, 4294901760
    %163 = vmatpush.msra.mxu0 %v162
    %v164 = vand.u32 %v88, 4294901760
    %165 = vmatpush.msra.mxu0 %v164
    %v166 = vand.u32 %v87, 4294901760
    %167 = vmatpush.msra.mxu0 %v166
    %v168 = vand.u32 %v86, 4294901760
    %169 = vmatpush.msra.mxu0 %v168
    %v170 = vand.u32 %v85, 4294901760
    %171 = vmatpush.msra.mxu0 %v170
    %v172 = vand.u32 %v84, 4294901760
    %173 = vmatpush.msra.mxu0 %v172
    %v174 = vand.u32 %v83, 4294901760
    %175 = vmatpush.msra.mxu0 %v174
    %v176 = vand.u32 %v82, 4294901760
    %177 = vmatpush.msra.mxu0 %v176
    %v178 = vand.u32 %v78, 4294901760
    %v179 = vsub.f32 %v78, %v178
    %v180 = vand.u32 %v179, 4294901760
    %v181 = vsub.f32 %v179, %v180
    %v182 = vand.u32 %v181, 4294901760
    %183 = vmatmul.f32.gmra.mxu0 %v182
    %v184 = vpop.f32.mrf.mxu0
    %v185 = vadd.f32 0.0, %v184
    %186 = vdwg.mxu0
    %v187 = vand.u32 %v97, 4294901760
    %v188 = vsub.f32 %v97, %v187
    %v189 = vand.u32 %v188, 4294901760
    %v190 = vsub.f32 %v188, %v189
    %v191 = vand.u32 %v190, 4294901760
    %192 = vmatpush.msra.mxu0 %v191
    %v193 = vand.u32 %v96, 4294901760
    %v194 = vsub.f32 %v96, %v193
    %v195 = vand.u32 %v194, 4294901760
    %v196 = vsub.f32 %v194, %v195
    %v197 = vand.u32 %v196, 4294901760
    %198 = vmatpush.msra.mxu0 %v197
    %v199 = vand.u32 %v95, 4294901760
    %v200 = vsub.f32 %v95, %v199
    %v201 = vand.u32 %v200, 4294901760
    %v202 = vsub.f32 %v200, %v201
    %v203 = vand.u32 %v202, 4294901760
    %204 = vmatpush.msra.mxu0 %v203
    %v205 = vand.u32 %v94, 4294901760
    %v206 = vsub.f32 %v94, %v205
    %v207 = vand.u32 %v206, 4294901760
    %v208 = vsub.f32 %v206, %v207
    %v209 = vand.u32 %v208, 4294901760
    %210 = vmatpush.msra.mxu0 %v209
    %v211 = vand.u32 %v93, 4294901760
    %v212 = vsub.f32 %v93, %v211
    %v213 = vand.u32 %v212, 4294901760
    %v214 = vsub.f32 %v212, %v213
    %v215 = vand.u32 %v214, 4294901760
    %216 = vmatpush.msra.mxu0 %v215
    %v217 = vand.u32 %v92, 4294901760
    %v218 = vsub.f32 %v92, %v217
    %v219 = vand.u32 %v218, 4294901760
    %v220 = vsub.f32 %v218, %v219
    %v221 = vand.u32 %v220, 4294901760
    %222 = vmatpush.msra.mxu0 %v221
    %v223 = vand.u32 %v91, 4294901760
    %v224 = vsub.f32 %v91, %v223
    %v225 = vand.u32 %v224, 4294901760
    %v226 = vsub.f32 %v224, %v225
    %v227 = vand.u32 %v226, 4294901760
    %228 = vmatpush.msra.mxu0 %v227
    %v229 = vand.u32 %v90, 4294901760
    %v230 = vsub.f32 %v90, %v229
    %v231 = vand.u32 %v230, 4294901760
    %v232 = vsub.f32 %v230, %v231
    %v233 = vand.u32 %v232, 4294901760
    %234 = vmatpush.msra.mxu0 %v233
    %v235 = vand.u32 %v89, 4294901760
    %v236 = vsub.f32 %v89, %v235
    %v237 = vand.u32 %v236, 4294901760
    %v238 = vsub.f32 %v236, %v237
    %v239 = vand.u32 %v238, 4294901760
    %240 = vmatpush.msra.mxu0 %v239
    %v241 = vand.u32 %v88, 4294901760
    %v242 = vsub.f32 %v88, %v241
    %v243 = vand.u32 %v242, 4294901760
    %v244 = vsub.f32 %v242, %v243
    %v245 = vand.u32 %v244, 4294901760
    %246 = vmatpush.msra.mxu0 %v245
    %v247 = vand.u32 %v87, 4294901760
    %v248 = vsub.f32 %v87, %v247
    %v249 = vand.u32 %v248, 4294901760
    %v250 = vsub.f32 %v248, %v249
    %v251 = vand.u32 %v250, 4294901760
    %252 = vmatpush.msra.mxu0 %v251
    %v253 = vand.u32 %v86, 4294901760
    %v254 = vsub.f32 %v86, %v253
    %v255 = vand.u32 %v254, 4294901760
    %v256 = vsub.f32 %v254, %v255
    %v257 = vand.u32 %v256, 4294901760
    %258 = vmatpush.msra.mxu0 %v257
    %v259 = vand.u32 %v85, 4294901760
    %v260 = vsub.f32 %v85, %v259
    %v261 = vand.u32 %v260, 4294901760
    %v262 = vsub.f32 %v260, %v261
    %v263 = vand.u32 %v262, 4294901760
    %264 = vmatpush.msra.mxu0 %v263
    %v265 = vand.u32 %v84, 4294901760
    %v266 = vsub.f32 %v84, %v265
    %v267 = vand.u32 %v266, 4294901760
    %v268 = vsub.f32 %v266, %v267
    %v269 = vand.u32 %v268, 4294901760
    %270 = vmatpush.msra.mxu0 %v269
    %v271 = vand.u32 %v83, 4294901760
    %v272 = vsub.f32 %v83, %v271
    %v273 = vand.u32 %v272, 4294901760
    %v274 = vsub.f32 %v272, %v273
    %v275 = vand.u32 %v274, 4294901760
    %276 = vmatpush.msra.mxu0 %v275
    %v277 = vand.u32 %v82, 4294901760
    %v278 = vsub.f32 %v82, %v277
    %v279 = vand.u32 %v278, 4294901760
    %v280 = vsub.f32 %v278, %v279
    %v281 = vand.u32 %v280, 4294901760
    %282 = vmatpush.msra.mxu0 %v281
    %v283 = vand.u32 %v78, 4294901760
    %284 = vmatmul.f32.gmra.mxu0 %v283
    %v285 = vpop.f32.mrf.mxu0
    %v286 = vadd.f32 %v185, %v285
    %287 = vdwg.mxu0
    %v288 = vand.u32 %v97, 4294901760
    %v289 = vsub.f32 %v97, %v288
    %290 = vmatpush.msra.mxu0 %v289
    %v291 = vand.u32 %v96, 4294901760
    %v292 = vsub.f32 %v96, %v291
    %293 = vmatpush.msra.mxu0 %v292
    %v294 = vand.u32 %v95, 4294901760
    %v295 = vsub.f32 %v95, %v294
    %296 = vmatpush.msra.mxu0 %v295
    %v297 = vand.u32 %v94, 4294901760
    %v298 = vsub.f32 %v94, %v297
    %299 = vmatpush.msra.mxu0 %v298
    %v300 = vand.u32 %v93, 4294901760
    %v301 = vsub.f32 %v93, %v300
    %302 = vmatpush.msra.mxu0 %v301
    %v303 = vand.u32 %v92, 4294901760
    %v304 = vsub.f32 %v92, %v303
    %305 = vmatpush.msra.mxu0 %v304
    %v306 = vand.u32 %v91, 4294901760
    %v307 = vsub.f32 %v91, %v306
    %308 = vmatpush.msra.mxu0 %v307
    %v309 = vand.u32 %v90, 4294901760
    %v310 = vsub.f32 %v90, %v309
    %311 = vmatpush.msra.mxu0 %v310
    %v312 = vand.u32 %v89, 4294901760
    %v313 = vsub.f32 %v89, %v312
    %314 = vmatpush.msra.mxu0 %v313
    %v315 = vand.u32 %v88, 4294901760
    %v316 = vsub.f32 %v88, %v315
    %317 = vmatpush.msra.mxu0 %v316
    %v318 = vand.u32 %v87, 4294901760
    %v319 = vsub.f32 %v87, %v318
    %320 = vmatpush.msra.mxu0 %v319
    %v321 = vand.u32 %v86, 4294901760
    %v322 = vsub.f32 %v86, %v321
    %323 = vmatpush.msra.mxu0 %v322
    %v324 = vand.u32 %v85, 4294901760
    %v325 = vsub.f32 %v85, %v324
    %326 = vmatpush.msra.mxu0 %v325
    %v327 = vand.u32 %v84, 4294901760
    %v328 = vsub.f32 %v84, %v327
    %329 = vmatpush.msra.mxu0 %v328
    %v330 = vand.u32 %v83, 4294901760
    %v331 = vsub.f32 %v83, %v330
    %332 = vmatpush.msra.mxu0 %v331
    %v333 = vand.u32 %v82, 4294901760
    %v334 = vsub.f32 %v82, %v333
    %335 = vmatpush.msra.mxu0 %v334
    %v336 = vand.u32 %v78, 4294901760
    %v337 = vsub.f32 %v78, %v336
    %338 = vmatmul.f32.gmra.mxu0 %v337
    %v339 = vpop.f32.mrf.mxu0
    %v340 = vadd.f32 %v286, %v339
    %341 = vdwg.mxu0
    %v342 = vand.u32 %v97, 4294901760
    %343 = vmatpush.msra.mxu0 %v342
    %v344 = vand.u32 %v96, 4294901760
    %345 = vmatpush.msra.mxu0 %v344
    %v346 = vand.u32 %v95, 4294901760
    %347 = vmatpush.msra.mxu0 %v346
    %v348 = vand.u32 %v94, 4294901760
    %349 = vmatpush.msra.mxu0 %v348
    %v350 = vand.u32 %v93, 4294901760
    %351 = vmatpush.msra.mxu0 %v350
    %v352 = vand.u32 %v92, 4294901760
    %353 = vmatpush.msra.mxu0 %v352
    %v354 = vand.u32 %v91, 4294901760
    %355 = vmatpush.msra.mxu0 %v354
    %v356 = vand.u32 %v90, 4294901760
    %357 = vmatpush.msra.mxu0 %v356
    %v358 = vand.u32 %v89, 4294901760
    %359 = vmatpush.msra.mxu0 %v358
    %v360 = vand.u32 %v88, 4294901760
    %361 = vmatpush.msra.mxu0 %v360
    %v362 = vand.u32 %v87, 4294901760
    %363 = vmatpush.msra.mxu0 %v362
    %v364 = vand.u32 %v86, 4294901760
    %365 = vmatpush.msra.mxu0 %v364
    %v366 = vand.u32 %v85, 4294901760
    %367 = vmatpush.msra.mxu0 %v366
    %v368 = vand.u32 %v84, 4294901760
    %369 = vmatpush.msra.mxu0 %v368
    %v370 = vand.u32 %v83, 4294901760
    %371 = vmatpush.msra.mxu0 %v370
    %v372 = vand.u32 %v82, 4294901760
    %373 = vmatpush.msra.mxu0 %v372
    %v374 = vand.u32 %v78, 4294901760
    %v375 = vsub.f32 %v78, %v374
    %v376 = vand.u32 %v375, 4294901760
    %377 = vmatmul.f32.gmra.mxu0 %v376
    %v378 = vpop.f32.mrf.mxu0
    %v379 = vadd.f32 %v340, %v378
    %380 = vdwg.mxu0
    %v381 = vand.u32 %v97, 4294901760
    %v382 = vsub.f32 %v97, %v381
    %v383 = vand.u32 %v382, 4294901760
    %384 = vmatpush.msra.mxu0 %v383
    %v385 = vand.u32 %v96, 4294901760
    %v386 = vsub.f32 %v96, %v385
    %v387 = vand.u32 %v386, 4294901760
    %388 = vmatpush.msra.mxu0 %v387
    %v389 = vand.u32 %v95, 4294901760
    %v390 = vsub.f32 %v95, %v389
    %v391 = vand.u32 %v390, 4294901760
    %392 = vmatpush.msra.mxu0 %v391
    %v393 = vand.u32 %v94, 4294901760
    %v394 = vsub.f32 %v94, %v393
    %v395 = vand.u32 %v394, 4294901760
    %396 = vmatpush.msra.mxu0 %v395
    %v397 = vand.u32 %v93, 4294901760
    %v398 = vsub.f32 %v93, %v397
    %v399 = vand.u32 %v398, 4294901760
    %400 = vmatpush.msra.mxu0 %v399
    %v401 = vand.u32 %v92, 4294901760
    %v402 = vsub.f32 %v92, %v401
    %v403 = vand.u32 %v402, 4294901760
    %404 = vmatpush.msra.mxu0 %v403
    %v405 = vand.u32 %v91, 4294901760
    %v406 = vsub.f32 %v91, %v405
    %v407 = vand.u32 %v406, 4294901760
    %408 = vmatpush.msra.mxu0 %v407
    %v409 = vand.u32 %v90, 4294901760
    %v410 = vsub.f32 %v90, %v409
    %v411 = vand.u32 %v410, 4294901760
    %412 = vmatpush.msra.mxu0 %v411
    %v413 = vand.u32 %v89, 4294901760
    %v414 = vsub.f32 %v89, %v413
    %v415 = vand.u32 %v414, 4294901760
    %416 = vmatpush.msra.mxu0 %v415
    %v417 = vand.u32 %v88, 4294901760
    %v418 = vsub.f32 %v88, %v417
    %v419 = vand.u32 %v418, 4294901760
    %420 = vmatpush.msra.mxu0 %v419
    %v421 = vand.u32 %v87, 4294901760
    %v422 = vsub.f32 %v87, %v421
    %v423 = vand.u32 %v422, 4294901760
    %424 = vmatpush.msra.mxu0 %v423
    %v425 = vand.u32 %v86, 4294901760
    %v426 = vsub.f32 %v86, %v425
    %v427 = vand.u32 %v426, 4294901760
    %428 = vmatpush.msra.mxu0 %v427
    %v429 = vand.u32 %v85, 4294901760
    %v430 = vsub.f32 %v85, %v429
    %v431 = vand.u32 %v430, 4294901760
    %432 = vmatpush.msra.mxu0 %v431
    %v433 = vand.u32 %v84, 4294901760
    %v434 = vsub.f32 %v84, %v433
    %v435 = vand.u32 %v434, 4294901760
    %436 = vmatpush.msra.mxu0 %v435
    %v437 = vand.u32 %v83, 4294901760
    %v438 = vsub.f32 %v83, %v437
    %v439 = vand.u32 %v438, 4294901760
    %440 = vmatpush.msra.mxu0 %v439
    %v441 = vand.u32 %v82, 4294901760
    %v442 = vsub.f32 %v82, %v441
    %v443 = vand.u32 %v442, 4294901760
    %444 = vmatpush.msra.mxu0 %v443
    %v445 = vand.u32 %v78, 4294901760
    %446 = vmatmul.f32.gmra.mxu0 %v445
    %v447 = vpop.f32.mrf.mxu0
    %v448 = vadd.f32 %v379, %v447
    %449 = vdwg.mxu0
    %v450 = vand.u32 %v97, 4294901760
    %451 = vmatpush.msra.mxu0 %v450
    %v452 = vand.u32 %v96, 4294901760
    %453 = vmatpush.msra.mxu0 %v452
    %v454 = vand.u32 %v95, 4294901760
    %455 = vmatpush.msra.mxu0 %v454
    %v456 = vand.u32 %v94, 4294901760
    %457 = vmatpush.msra.mxu0 %v456
    %v458 = vand.u32 %v93, 4294901760
    %459 = vmatpush.msra.mxu0 %v458
    %v460 = vand.u32 %v92, 4294901760
    %461 = vmatpush.msra.mxu0 %v460
    %v462 = vand.u32 %v91, 4294901760
    %463 = vmatpush.msra.mxu0 %v462
    %v464 = vand.u32 %v90, 4294901760
    %465 = vmatpush.msra.mxu0 %v464
    %v466 = vand.u32 %v89, 4294901760
    %467 = vmatpush.msra.mxu0 %v466
    %v468 = vand.u32 %v88, 4294901760
    %469 = vmatpush.msra.mxu0 %v468
    %v470 = vand.u32 %v87, 4294901760
    %471 = vmatpush.msra.mxu0 %v470
    %v472 = vand.u32 %v86, 4294901760
    %473 = vmatpush.msra.mxu0 %v472
    %v474 = vand.u32 %v85, 4294901760
    %475 = vmatpush.msra.mxu0 %v474
    %v476 = vand.u32 %v84, 4294901760
    %477 = vmatpush.msra.mxu0 %v476
    %v478 = vand.u32 %v83, 4294901760
    %479 = vmatpush.msra.mxu0 %v478
    %v480 = vand.u32 %v82, 4294901760
    %481 = vmatpush.msra.mxu0 %v480
    %v482 = vand.u32 %v78, 4294901760
    %483 = vmatmul.f32.gmra.mxu0 %v482
    %v484 = vpop.f32.mrf.mxu0
    %v485 = vadd.f32 %v448, %v484
    %486 = vdwg.mxu0
    %v487 = vand.u32 %v113, 4294901760
    %488 = vmatpush.msra.mxu0 %v487
    %v489 = vand.u32 %v112, 4294901760
    %490 = vmatpush.msra.mxu0 %v489
    %v491 = vand.u32 %v111, 4294901760
    %492 = vmatpush.msra.mxu0 %v491
    %v493 = vand.u32 %v110, 4294901760
    %494 = vmatpush.msra.mxu0 %v493
    %v495 = vand.u32 %v109, 4294901760
    %496 = vmatpush.msra.mxu0 %v495
    %v497 = vand.u32 %v108, 4294901760
    %498 = vmatpush.msra.mxu0 %v497
    %v499 = vand.u32 %v107, 4294901760
    %500 = vmatpush.msra.mxu0 %v499
    %v501 = vand.u32 %v106, 4294901760
    %502 = vmatpush.msra.mxu0 %v501
    %v503 = vand.u32 %v105, 4294901760
    %504 = vmatpush.msra.mxu0 %v503
    %v505 = vand.u32 %v104, 4294901760
    %506 = vmatpush.msra.mxu0 %v505
    %v507 = vand.u32 %v103, 4294901760
    %508 = vmatpush.msra.mxu0 %v507
    %v509 = vand.u32 %v102, 4294901760
    %510 = vmatpush.msra.mxu0 %v509
    %v511 = vand.u32 %v101, 4294901760
    %512 = vmatpush.msra.mxu0 %v511
    %v513 = vand.u32 %v100, 4294901760
    %514 = vmatpush.msra.mxu0 %v513
    %v515 = vand.u32 %v99, 4294901760
    %516 = vmatpush.msra.mxu0 %v515
    %v517 = vand.u32 %v98, 4294901760
    %518 = vmatpush.msra.mxu0 %v517
    %v519 = vand.u32 %v79, 4294901760
    %v520 = vsub.f32 %v79, %v519
    %v521 = vand.u32 %v520, 4294901760
    %v522 = vsub.f32 %v520, %v521
    %v523 = vand.u32 %v522, 4294901760
    %524 = vmatmul.f32.gmra.mxu0 %v523
    %v525 = vpop.f32.mrf.mxu0
    %v526 = vadd.f32 %v485, %v525
    %527 = vdwg.mxu0
    %v528 = vand.u32 %v113, 4294901760
    %v529 = vsub.f32 %v113, %v528
    %v530 = vand.u32 %v529, 4294901760
    %v531 = vsub.f32 %v529, %v530
    %v532 = vand.u32 %v531, 4294901760
    %533 = vmatpush.msra.mxu0 %v532
    %v534 = vand.u32 %v112, 4294901760
    %v535 = vsub.f32 %v112, %v534
    %v536 = vand.u32 %v535, 4294901760
    %v537 = vsub.f32 %v535, %v536
    %v538 = vand.u32 %v537, 4294901760
    %539 = vmatpush.msra.mxu0 %v538
    %v540 = vand.u32 %v111, 4294901760
    %v541 = vsub.f32 %v111, %v540
    %v542 = vand.u32 %v541, 4294901760
    %v543 = vsub.f32 %v541, %v542
    %v544 = vand.u32 %v543, 4294901760
    %545 = vmatpush.msra.mxu0 %v544
    %v546 = vand.u32 %v110, 4294901760
    %v547 = vsub.f32 %v110, %v546
    %v548 = vand.u32 %v547, 4294901760
    %v549 = vsub.f32 %v547, %v548
    %v550 = vand.u32 %v549, 4294901760
    %551 = vmatpush.msra.mxu0 %v550
    %v552 = vand.u32 %v109, 4294901760
    %v553 = vsub.f32 %v109, %v552
    %v554 = vand.u32 %v553, 4294901760
    %v555 = vsub.f32 %v553, %v554
    %v556 = vand.u32 %v555, 4294901760
    %557 = vmatpush.msra.mxu0 %v556
    %v558 = vand.u32 %v108, 4294901760
    %v559 = vsub.f32 %v108, %v558
    %v560 = vand.u32 %v559, 4294901760
    %v561 = vsub.f32 %v559, %v560
    %v562 = vand.u32 %v561, 4294901760
    %563 = vmatpush.msra.mxu0 %v562
    %v564 = vand.u32 %v107, 4294901760
    %v565 = vsub.f32 %v107, %v564
    %v566 = vand.u32 %v565, 4294901760
    %v567 = vsub.f32 %v565, %v566
    %v568 = vand.u32 %v567, 4294901760
    %569 = vmatpush.msra.mxu0 %v568
    %v570 = vand.u32 %v106, 4294901760
    %v571 = vsub.f32 %v106, %v570
    %v572 = vand.u32 %v571, 4294901760
    %v573 = vsub.f32 %v571, %v572
    %v574 = vand.u32 %v573, 4294901760
    %575 = vmatpush.msra.mxu0 %v574
    %v576 = vand.u32 %v105, 4294901760
    %v577 = vsub.f32 %v105, %v576
    %v578 = vand.u32 %v577, 4294901760
    %v579 = vsub.f32 %v577, %v578
    %v580 = vand.u32 %v579, 4294901760
    %581 = vmatpush.msra.mxu0 %v580
    %v582 = vand.u32 %v104, 4294901760
    %v583 = vsub.f32 %v104, %v582
    %v584 = vand.u32 %v583, 4294901760
    %v585 = vsub.f32 %v583, %v584
    %v586 = vand.u32 %v585, 4294901760
    %587 = vmatpush.msra.mxu0 %v586
    %v588 = vand.u32 %v103, 4294901760
    %v589 = vsub.f32 %v103, %v588
    %v590 = vand.u32 %v589, 4294901760
    %v591 = vsub.f32 %v589, %v590
    %v592 = vand.u32 %v591, 4294901760
    %593 = vmatpush.msra.mxu0 %v592
    %v594 = vand.u32 %v102, 4294901760
    %v595 = vsub.f32 %v102, %v594
    %v596 = vand.u32 %v595, 4294901760
    %v597 = vsub.f32 %v595, %v596
    %v598 = vand.u32 %v597, 4294901760
    %599 = vmatpush.msra.mxu0 %v598
    %v600 = vand.u32 %v101, 4294901760
    %v601 = vsub.f32 %v101, %v600
    %v602 = vand.u32 %v601, 4294901760
    %v603 = vsub.f32 %v601, %v602
    %v604 = vand.u32 %v603, 4294901760
    %605 = vmatpush.msra.mxu0 %v604
    %v606 = vand.u32 %v100, 4294901760
    %v607 = vsub.f32 %v100, %v606
    %v608 = vand.u32 %v607, 4294901760
    %v609 = vsub.f32 %v607, %v608
    %v610 = vand.u32 %v609, 4294901760
    %611 = vmatpush.msra.mxu0 %v610
    %v612 = vand.u32 %v99, 4294901760
    %v613 = vsub.f32 %v99, %v612
    %v614 = vand.u32 %v613, 4294901760
    %v615 = vsub.f32 %v613, %v614
    %v616 = vand.u32 %v615, 4294901760
    %617 = vmatpush.msra.mxu0 %v616
    %v618 = vand.u32 %v98, 4294901760
    %v619 = vsub.f32 %v98, %v618
    %v620 = vand.u32 %v619, 4294901760
    %v621 = vsub.f32 %v619, %v620
    %v622 = vand.u32 %v621, 4294901760
    %623 = vmatpush.msra.mxu0 %v622
    %v624 = vand.u32 %v79, 4294901760
    %625 = vmatmul.f32.gmra.mxu0 %v624
    %v626 = vpop.f32.mrf.mxu0
    %v627 = vadd.f32 %v526, %v626
    %628 = vdwg.mxu0
    %v629 = vand.u32 %v113, 4294901760
    %v630 = vsub.f32 %v113, %v629
    %631 = vmatpush.msra.mxu0 %v630
    %v632 = vand.u32 %v112, 4294901760
    %v633 = vsub.f32 %v112, %v632
    %634 = vmatpush.msra.mxu0 %v633
    %v635 = vand.u32 %v111, 4294901760
    %v636 = vsub.f32 %v111, %v635
    %637 = vmatpush.msra.mxu0 %v636
    %v638 = vand.u32 %v110, 4294901760
    %v639 = vsub.f32 %v110, %v638
    %640 = vmatpush.msra.mxu0 %v639
    %v641 = vand.u32 %v109, 4294901760
    %v642 = vsub.f32 %v109, %v641
    %643 = vmatpush.msra.mxu0 %v642
    %v644 = vand.u32 %v108, 4294901760
    %v645 = vsub.f32 %v108, %v644
    %646 = vmatpush.msra.mxu0 %v645
    %v647 = vand.u32 %v107, 4294901760
    %v648 = vsub.f32 %v107, %v647
    %649 = vmatpush.msra.mxu0 %v648
    %v650 = vand.u32 %v106, 4294901760
    %v651 = vsub.f32 %v106, %v650
    %652 = vmatpush.msra.mxu0 %v651
    %v653 = vand.u32 %v105, 4294901760
    %v654 = vsub.f32 %v105, %v653
    %655 = vmatpush.msra.mxu0 %v654
    %v656 = vand.u32 %v104, 4294901760
    %v657 = vsub.f32 %v104, %v656
    %658 = vmatpush.msra.mxu0 %v657
    %v659 = vand.u32 %v103, 4294901760
    %v660 = vsub.f32 %v103, %v659
    %661 = vmatpush.msra.mxu0 %v660
    %v662 = vand.u32 %v102, 4294901760
    %v663 = vsub.f32 %v102, %v662
    %664 = vmatpush.msra.mxu0 %v663
    %v665 = vand.u32 %v101, 4294901760
    %v666 = vsub.f32 %v101, %v665
    %667 = vmatpush.msra.mxu0 %v666
    %v668 = vand.u32 %v100, 4294901760
    %v669 = vsub.f32 %v100, %v668
    %670 = vmatpush.msra.mxu0 %v669
    %v671 = vand.u32 %v99, 4294901760
    %v672 = vsub.f32 %v99, %v671
    %673 = vmatpush.msra.mxu0 %v672
    %v674 = vand.u32 %v98, 4294901760
    %v675 = vsub.f32 %v98, %v674
    %676 = vmatpush.msra.mxu0 %v675
    %v677 = vand.u32 %v79, 4294901760
    %v678 = vsub.f32 %v79, %v677
    %679 = vmatmul.f32.gmra.mxu0 %v678
    %v680 = vpop.f32.mrf.mxu0
    %v681 = vadd.f32 %v627, %v680
    %682 = vdwg.mxu0
    %v683 = vand.u32 %v113, 4294901760
    %684 = vmatpush.msra.mxu0 %v683
    %v685 = vand.u32 %v112, 4294901760
    %686 = vmatpush.msra.mxu0 %v685
    %v687 = vand.u32 %v111, 4294901760
    %688 = vmatpush.msra.mxu0 %v687
    %v689 = vand.u32 %v110, 4294901760
    %690 = vmatpush.msra.mxu0 %v689
    %v691 = vand.u32 %v109, 4294901760
    %692 = vmatpush.msra.mxu0 %v691
    %v693 = vand.u32 %v108, 4294901760
    %694 = vmatpush.msra.mxu0 %v693
    %v695 = vand.u32 %v107, 4294901760
    %696 = vmatpush.msra.mxu0 %v695
    %v697 = vand.u32 %v106, 4294901760
    %698 = vmatpush.msra.mxu0 %v697
    %v699 = vand.u32 %v105, 4294901760
    %700 = vmatpush.msra.mxu0 %v699
    %v701 = vand.u32 %v104, 4294901760
    %702 = vmatpush.msra.mxu0 %v701
    %v703 = vand.u32 %v103, 4294901760
    %704 = vmatpush.msra.mxu0 %v703
    %v705 = vand.u32 %v102, 4294901760
    %706 = vmatpush.msra.mxu0 %v705
    %v707 = vand.u32 %v101, 4294901760
    %708 = vmatpush.msra.mxu0 %v707
    %v709 = vand.u32 %v100, 4294901760
    %710 = vmatpush.msra.mxu0 %v709
    %v711 = vand.u32 %v99, 4294901760
    %712 = vmatpush.msra.mxu0 %v711
    %v713 = vand.u32 %v98, 4294901760
    %714 = vmatpush.msra.mxu0 %v713
    %v715 = vand.u32 %v79, 4294901760
    %v716 = vsub.f32 %v79, %v715
    %v717 = vand.u32 %v716, 4294901760
    %718 = vmatmul.f32.gmra.mxu0 %v717
    %v719 = vpop.f32.mrf.mxu0
    %v720 = vadd.f32 %v681, %v719
    %721 = vdwg.mxu0
    %v722 = vand.u32 %v113, 4294901760
    %v723 = vsub.f32 %v113, %v722
    %v724 = vand.u32 %v723, 4294901760
    %725 = vmatpush.msra.mxu0 %v724
    %v726 = vand.u32 %v112, 4294901760
    %v727 = vsub.f32 %v112, %v726
    %v728 = vand.u32 %v727, 4294901760
    %729 = vmatpush.msra.mxu0 %v728
    %v730 = vand.u32 %v111, 4294901760
    %v731 = vsub.f32 %v111, %v730
    %v732 = vand.u32 %v731, 4294901760
    %733 = vmatpush.msra.mxu0 %v732
    %v734 = vand.u32 %v110, 4294901760
    %v735 = vsub.f32 %v110, %v734
    %v736 = vand.u32 %v735, 4294901760
    %737 = vmatpush.msra.mxu0 %v736
    %v738 = vand.u32 %v109, 4294901760
    %v739 = vsub.f32 %v109, %v738
    %v740 = vand.u32 %v739, 4294901760
    %741 = vmatpush.msra.mxu0 %v740
    %v742 = vand.u32 %v108, 4294901760
    %v743 = vsub.f32 %v108, %v742
    %v744 = vand.u32 %v743, 4294901760
    %745 = vmatpush.msra.mxu0 %v744
    %v746 = vand.u32 %v107, 4294901760
    %v747 = vsub.f32 %v107, %v746
    %v748 = vand.u32 %v747, 4294901760
    %749 = vmatpush.msra.mxu0 %v748
    %v750 = vand.u32 %v106, 4294901760
    %v751 = vsub.f32 %v106, %v750
    %v752 = vand.u32 %v751, 4294901760
    %753 = vmatpush.msra.mxu0 %v752
    %v754 = vand.u32 %v105, 4294901760
    %v755 = vsub.f32 %v105, %v754
    %v756 = vand.u32 %v755, 4294901760
    %757 = vmatpush.msra.mxu0 %v756
    %v758 = vand.u32 %v104, 4294901760
    %v759 = vsub.f32 %v104, %v758
    %v760 = vand.u32 %v759, 4294901760
    %761 = vmatpush.msra.mxu0 %v760
    %v762 = vand.u32 %v103, 4294901760
    %v763 = vsub.f32 %v103, %v762
    %v764 = vand.u32 %v763, 4294901760
    %765 = vmatpush.msra.mxu0 %v764
    %v766 = vand.u32 %v102, 4294901760
    %v767 = vsub.f32 %v102, %v766
    %v768 = vand.u32 %v767, 4294901760
    %769 = vmatpush.msra.mxu0 %v768
    %v770 = vand.u32 %v101, 4294901760
    %v771 = vsub.f32 %v101, %v770
    %v772 = vand.u32 %v771, 4294901760
    %773 = vmatpush.msra.mxu0 %v772
    %v774 = vand.u32 %v100, 4294901760
    %v775 = vsub.f32 %v100, %v774
    %v776 = vand.u32 %v775, 4294901760
    %777 = vmatpush.msra.mxu0 %v776
    %v778 = vand.u32 %v99, 4294901760
    %v779 = vsub.f32 %v99, %v778
    %v780 = vand.u32 %v779, 4294901760
    %781 = vmatpush.msra.mxu0 %v780
    %v782 = vand.u32 %v98, 4294901760
    %v783 = vsub.f32 %v98, %v782
    %v784 = vand.u32 %v783, 4294901760
    %785 = vmatpush.msra.mxu0 %v784
    %v786 = vand.u32 %v79, 4294901760
    %787 = vmatmul.f32.gmra.mxu0 %v786
    %v788 = vpop.f32.mrf.mxu0
    %v789 = vadd.f32 %v720, %v788
    %790 = vdwg.mxu0
    %v791 = vand.u32 %v113, 4294901760
    %792 = vmatpush.msra.mxu0 %v791
    %v793 = vand.u32 %v112, 4294901760
    %794 = vmatpush.msra.mxu0 %v793
    %v795 = vand.u32 %v111, 4294901760
    %796 = vmatpush.msra.mxu0 %v795
    %v797 = vand.u32 %v110, 4294901760
    %798 = vmatpush.msra.mxu0 %v797
    %v799 = vand.u32 %v109, 4294901760
    %800 = vmatpush.msra.mxu0 %v799
    %v801 = vand.u32 %v108, 4294901760
    %802 = vmatpush.msra.mxu0 %v801
    %v803 = vand.u32 %v107, 4294901760
    %804 = vmatpush.msra.mxu0 %v803
    %v805 = vand.u32 %v106, 4294901760
    %806 = vmatpush.msra.mxu0 %v805
    %v807 = vand.u32 %v105, 4294901760
    %808 = vmatpush.msra.mxu0 %v807
    %v809 = vand.u32 %v104, 4294901760
    %810 = vmatpush.msra.mxu0 %v809
    %v811 = vand.u32 %v103, 4294901760
    %812 = vmatpush.msra.mxu0 %v811
    %v813 = vand.u32 %v102, 4294901760
    %814 = vmatpush.msra.mxu0 %v813
    %v815 = vand.u32 %v101, 4294901760
    %816 = vmatpush.msra.mxu0 %v815
    %v817 = vand.u32 %v100, 4294901760
    %818 = vmatpush.msra.mxu0 %v817
    %v819 = vand.u32 %v99, 4294901760
    %820 = vmatpush.msra.mxu0 %v819
    %v821 = vand.u32 %v98, 4294901760
    %822 = vmatpush.msra.mxu0 %v821
    %v823 = vand.u32 %v79, 4294901760
    %824 = vmatmul.f32.gmra.mxu0 %v823
    %v825 = vpop.f32.mrf.mxu0
    %v826 = vadd.f32 %v789, %v825
    %827 = vdwg.mxu0
    %v828 = vand.u32 %v129, 4294901760
    %829 = vmatpush.msra.mxu0 %v828
    %v830 = vand.u32 %v128, 4294901760
    %831 = vmatpush.msra.mxu0 %v830
    %v832 = vand.u32 %v127, 4294901760
    %833 = vmatpush.msra.mxu0 %v832
    %v834 = vand.u32 %v126, 4294901760
    %835 = vmatpush.msra.mxu0 %v834
    %v836 = vand.u32 %v125, 4294901760
    %837 = vmatpush.msra.mxu0 %v836
    %v838 = vand.u32 %v124, 4294901760
    %839 = vmatpush.msra.mxu0 %v838
    %v840 = vand.u32 %v123, 4294901760
    %841 = vmatpush.msra.mxu0 %v840
    %v842 = vand.u32 %v122, 4294901760
    %843 = vmatpush.msra.mxu0 %v842
    %v844 = vand.u32 %v121, 4294901760
    %845 = vmatpush.msra.mxu0 %v844
    %v846 = vand.u32 %v120, 4294901760
    %847 = vmatpush.msra.mxu0 %v846
    %v848 = vand.u32 %v119, 4294901760
    %849 = vmatpush.msra.mxu0 %v848
    %v850 = vand.u32 %v118, 4294901760
    %851 = vmatpush.msra.mxu0 %v850
    %v852 = vand.u32 %v117, 4294901760
    %853 = vmatpush.msra.mxu0 %v852
    %v854 = vand.u32 %v116, 4294901760
    %855 = vmatpush.msra.mxu0 %v854
    %v856 = vand.u32 %v115, 4294901760
    %857 = vmatpush.msra.mxu0 %v856
    %v858 = vand.u32 %v114, 4294901760
    %859 = vmatpush.msra.mxu0 %v858
    %v860 = vand.u32 %v80, 4294901760
    %v861 = vsub.f32 %v80, %v860
    %v862 = vand.u32 %v861, 4294901760
    %v863 = vsub.f32 %v861, %v862
    %v864 = vand.u32 %v863, 4294901760
    %865 = vmatmul.f32.gmra.mxu0 %v864
    %v866 = vpop.f32.mrf.mxu0
    %v867 = vadd.f32 %v826, %v866
    %868 = vdwg.mxu0
    %v869 = vand.u32 %v129, 4294901760
    %v870 = vsub.f32 %v129, %v869
    %v871 = vand.u32 %v870, 4294901760
    %v872 = vsub.f32 %v870, %v871
    %v873 = vand.u32 %v872, 4294901760
    %874 = vmatpush.msra.mxu0 %v873
    %v875 = vand.u32 %v128, 4294901760
    %v876 = vsub.f32 %v128, %v875
    %v877 = vand.u32 %v876, 4294901760
    %v878 = vsub.f32 %v876, %v877
    %v879 = vand.u32 %v878, 4294901760
    %880 = vmatpush.msra.mxu0 %v879
    %v881 = vand.u32 %v127, 4294901760
    %v882 = vsub.f32 %v127, %v881
    %v883 = vand.u32 %v882, 4294901760
    %v884 = vsub.f32 %v882, %v883
    %v885 = vand.u32 %v884, 4294901760
    %886 = vmatpush.msra.mxu0 %v885
    %v887 = vand.u32 %v126, 4294901760
    %v888 = vsub.f32 %v126, %v887
    %v889 = vand.u32 %v888, 4294901760
    %v890 = vsub.f32 %v888, %v889
    %v891 = vand.u32 %v890, 4294901760
    %892 = vmatpush.msra.mxu0 %v891
    %v893 = vand.u32 %v125, 4294901760
    %v894 = vsub.f32 %v125, %v893
    %v895 = vand.u32 %v894, 4294901760
    %v896 = vsub.f32 %v894, %v895
    %v897 = vand.u32 %v896, 4294901760
    %898 = vmatpush.msra.mxu0 %v897
    %v899 = vand.u32 %v124, 4294901760
    %v900 = vsub.f32 %v124, %v899
    %v901 = vand.u32 %v900, 4294901760
    %v902 = vsub.f32 %v900, %v901
    %v903 = vand.u32 %v902, 4294901760
    %904 = vmatpush.msra.mxu0 %v903
    %v905 = vand.u32 %v123, 4294901760
    %v906 = vsub.f32 %v123, %v905
    %v907 = vand.u32 %v906, 4294901760
    %v908 = vsub.f32 %v906, %v907
    %v909 = vand.u32 %v908, 4294901760
    %910 = vmatpush.msra.mxu0 %v909
    %v911 = vand.u32 %v122, 4294901760
    %v912 = vsub.f32 %v122, %v911
    %v913 = vand.u32 %v912, 4294901760
    %v914 = vsub.f32 %v912, %v913
    %v915 = vand.u32 %v914, 4294901760
    %916 = vmatpush.msra.mxu0 %v915
    %v917 = vand.u32 %v121, 4294901760
    %v918 = vsub.f32 %v121, %v917
    %v919 = vand.u32 %v918, 4294901760
    %v920 = vsub.f32 %v918, %v919
    %v921 = vand.u32 %v920, 4294901760
    %922 = vmatpush.msra.mxu0 %v921
    %v923 = vand.u32 %v120, 4294901760
    %v924 = vsub.f32 %v120, %v923
    %v925 = vand.u32 %v924, 4294901760
    %v926 = vsub.f32 %v924, %v925
    %v927 = vand.u32 %v926, 4294901760
    %928 = vmatpush.msra.mxu0 %v927
    %v929 = vand.u32 %v119, 4294901760
    %v930 = vsub.f32 %v119, %v929
    %v931 = vand.u32 %v930, 4294901760
    %v932 = vsub.f32 %v930, %v931
    %v933 = vand.u32 %v932, 4294901760
    %934 = vmatpush.msra.mxu0 %v933
    %v935 = vand.u32 %v118, 4294901760
    %v936 = vsub.f32 %v118, %v935
    %v937 = vand.u32 %v936, 4294901760
    %v938 = vsub.f32 %v936, %v937
    %v939 = vand.u32 %v938, 4294901760
    %940 = vmatpush.msra.mxu0 %v939
    %v941 = vand.u32 %v117, 4294901760
    %v942 = vsub.f32 %v117, %v941
    %v943 = vand.u32 %v942, 4294901760
    %v944 = vsub.f32 %v942, %v943
    %v945 = vand.u32 %v944, 4294901760
    %946 = vmatpush.msra.mxu0 %v945
    %v947 = vand.u32 %v116, 4294901760
    %v948 = vsub.f32 %v116, %v947
    %v949 = vand.u32 %v948, 4294901760
    %v950 = vsub.f32 %v948, %v949
    %v951 = vand.u32 %v950, 4294901760
    %952 = vmatpush.msra.mxu0 %v951
    %v953 = vand.u32 %v115, 4294901760
    %v954 = vsub.f32 %v115, %v953
    %v955 = vand.u32 %v954, 4294901760
    %v956 = vsub.f32 %v954, %v955
    %v957 = vand.u32 %v956, 4294901760
    %958 = vmatpush.msra.mxu0 %v957
    %v959 = vand.u32 %v114, 4294901760
    %v960 = vsub.f32 %v114, %v959
    %v961 = vand.u32 %v960, 4294901760
    %v962 = vsub.f32 %v960, %v961
    %v963 = vand.u32 %v962, 4294901760
    %964 = vmatpush.msra.mxu0 %v963
    %v965 = vand.u32 %v80, 4294901760
    %966 = vmatmul.f32.gmra.mxu0 %v965
    %v967 = vpop.f32.mrf.mxu0
    %v968 = vadd.f32 %v867, %v967
    %969 = vdwg.mxu0
    %v970 = vand.u32 %v129, 4294901760
    %v971 = vsub.f32 %v129, %v970
    %972 = vmatpush.msra.mxu0 %v971
    %v973 = vand.u32 %v128, 4294901760
    %v974 = vsub.f32 %v128, %v973
    %975 = vmatpush.msra.mxu0 %v974
    %v976 = vand.u32 %v127, 4294901760
    %v977 = vsub.f32 %v127, %v976
    %978 = vmatpush.msra.mxu0 %v977
    %v979 = vand.u32 %v126, 4294901760
    %v980 = vsub.f32 %v126, %v979
    %981 = vmatpush.msra.mxu0 %v980
    %v982 = vand.u32 %v125, 4294901760
    %v983 = vsub.f32 %v125, %v982
    %984 = vmatpush.msra.mxu0 %v983
    %v985 = vand.u32 %v124, 4294901760
    %v986 = vsub.f32 %v124, %v985
    %987 = vmatpush.msra.mxu0 %v986
    %v988 = vand.u32 %v123, 4294901760
    %v989 = vsub.f32 %v123, %v988
    %990 = vmatpush.msra.mxu0 %v989
    %v991 = vand.u32 %v122, 4294901760
    %v992 = vsub.f32 %v122, %v991
    %993 = vmatpush.msra.mxu0 %v992
    %v994 = vand.u32 %v121, 4294901760
    %v995 = vsub.f32 %v121, %v994
    %996 = vmatpush.msra.mxu0 %v995
    %v997 = vand.u32 %v120, 4294901760
    %v998 = vsub.f32 %v120, %v997
    %999 = vmatpush.msra.mxu0 %v998
    %v1000 = vand.u32 %v119, 4294901760
    %v1001 = vsub.f32 %v119, %v1000
    %1002 = vmatpush.msra.mxu0 %v1001
    %v1003 = vand.u32 %v118, 4294901760
    %v1004 = vsub.f32 %v118, %v1003
    %1005 = vmatpush.msra.mxu0 %v1004
    %v1006 = vand.u32 %v117, 4294901760
    %v1007 = vsub.f32 %v117, %v1006
    %1008 = vmatpush.msra.mxu0 %v1007
    %v1009 = vand.u32 %v116, 4294901760
    %v1010 = vsub.f32 %v116, %v1009
    %1011 = vmatpush.msra.mxu0 %v1010
    %v1012 = vand.u32 %v115, 4294901760
    %v1013 = vsub.f32 %v115, %v1012
    %1014 = vmatpush.msra.mxu0 %v1013
    %v1015 = vand.u32 %v114, 4294901760
    %v1016 = vsub.f32 %v114, %v1015
    %1017 = vmatpush.msra.mxu0 %v1016
    %v1018 = vand.u32 %v80, 4294901760
    %v1019 = vsub.f32 %v80, %v1018
    %1020 = vmatmul.f32.gmra.mxu0 %v1019
    %v1021 = vpop.f32.mrf.mxu0
    %v1022 = vadd.f32 %v968, %v1021
    %1023 = vdwg.mxu0
    %v1024 = vand.u32 %v129, 4294901760
    %1025 = vmatpush.msra.mxu0 %v1024
    %v1026 = vand.u32 %v128, 4294901760
    %1027 = vmatpush.msra.mxu0 %v1026
    %v1028 = vand.u32 %v127, 4294901760
    %1029 = vmatpush.msra.mxu0 %v1028
    %v1030 = vand.u32 %v126, 4294901760
    %1031 = vmatpush.msra.mxu0 %v1030
    %v1032 = vand.u32 %v125, 4294901760
    %1033 = vmatpush.msra.mxu0 %v1032
    %v1034 = vand.u32 %v124, 4294901760
    %1035 = vmatpush.msra.mxu0 %v1034
    %v1036 = vand.u32 %v123, 4294901760
    %1037 = vmatpush.msra.mxu0 %v1036
    %v1038 = vand.u32 %v122, 4294901760
    %1039 = vmatpush.msra.mxu0 %v1038
    %v1040 = vand.u32 %v121, 4294901760
    %1041 = vmatpush.msra.mxu0 %v1040
    %v1042 = vand.u32 %v120, 4294901760
    %1043 = vmatpush.msra.mxu0 %v1042
    %v1044 = vand.u32 %v119, 4294901760
    %1045 = vmatpush.msra.mxu0 %v1044
    %v1046 = vand.u32 %v118, 4294901760
    %1047 = vmatpush.msra.mxu0 %v1046
    %v1048 = vand.u32 %v117, 4294901760
    %1049 = vmatpush.msra.mxu0 %v1048
    %v1050 = vand.u32 %v116, 4294901760
    %1051 = vmatpush.msra.mxu0 %v1050
    %v1052 = vand.u32 %v115, 4294901760
    %1053 = vmatpush.msra.mxu0 %v1052
    %v1054 = vand.u32 %v114, 4294901760
    %1055 = vmatpush.msra.mxu0 %v1054
    %v1056 = vand.u32 %v80, 4294901760
    %v1057 = vsub.f32 %v80, %v1056
    %v1058 = vand.u32 %v1057, 4294901760
    %1059 = vmatmul.f32.gmra.mxu0 %v1058
    %v1060 = vpop.f32.mrf.mxu0
    %v1061 = vadd.f32 %v1022, %v1060
    %1062 = vdwg.mxu0
    %v1063 = vand.u32 %v129, 4294901760
    %v1064 = vsub.f32 %v129, %v1063
    %v1065 = vand.u32 %v1064, 4294901760
    %1066 = vmatpush.msra.mxu0 %v1065
    %v1067 = vand.u32 %v128, 4294901760
    %v1068 = vsub.f32 %v128, %v1067
    %v1069 = vand.u32 %v1068, 4294901760
    %1070 = vmatpush.msra.mxu0 %v1069
    %v1071 = vand.u32 %v127, 4294901760
    %v1072 = vsub.f32 %v127, %v1071
    %v1073 = vand.u32 %v1072, 4294901760
    %1074 = vmatpush.msra.mxu0 %v1073
    %v1075 = vand.u32 %v126, 4294901760
    %v1076 = vsub.f32 %v126, %v1075
    %v1077 = vand.u32 %v1076, 4294901760
    %1078 = vmatpush.msra.mxu0 %v1077
    %v1079 = vand.u32 %v125, 4294901760
    %v1080 = vsub.f32 %v125, %v1079
    %v1081 = vand.u32 %v1080, 4294901760
    %1082 = vmatpush.msra.mxu0 %v1081
    %v1083 = vand.u32 %v124, 4294901760
    %v1084 = vsub.f32 %v124, %v1083
    %v1085 = vand.u32 %v1084, 4294901760
    %1086 = vmatpush.msra.mxu0 %v1085
    %v1087 = vand.u32 %v123, 4294901760
    %v1088 = vsub.f32 %v123, %v1087
    %v1089 = vand.u32 %v1088, 4294901760
    %1090 = vmatpush.msra.mxu0 %v1089
    %v1091 = vand.u32 %v122, 4294901760
    %v1092 = vsub.f32 %v122, %v1091
    %v1093 = vand.u32 %v1092, 4294901760
    %1094 = vmatpush.msra.mxu0 %v1093
    %v1095 = vand.u32 %v121, 4294901760
    %v1096 = vsub.f32 %v121, %v1095
    %v1097 = vand.u32 %v1096, 4294901760
    %1098 = vmatpush.msra.mxu0 %v1097
    %v1099 = vand.u32 %v120, 4294901760
    %v1100 = vsub.f32 %v120, %v1099
    %v1101 = vand.u32 %v1100, 4294901760
    %1102 = vmatpush.msra.mxu0 %v1101
    %v1103 = vand.u32 %v119, 4294901760
    %v1104 = vsub.f32 %v119, %v1103
    %v1105 = vand.u32 %v1104, 4294901760
    %1106 = vmatpush.msra.mxu0 %v1105
    %v1107 = vand.u32 %v118, 4294901760
    %v1108 = vsub.f32 %v118, %v1107
    %v1109 = vand.u32 %v1108, 4294901760
    %1110 = vmatpush.msra.mxu0 %v1109
    %v1111 = vand.u32 %v117, 4294901760
    %v1112 = vsub.f32 %v117, %v1111
    %v1113 = vand.u32 %v1112, 4294901760
    %1114 = vmatpush.msra.mxu0 %v1113
    %v1115 = vand.u32 %v116, 4294901760
    %v1116 = vsub.f32 %v116, %v1115
    %v1117 = vand.u32 %v1116, 4294901760
    %1118 = vmatpush.msra.mxu0 %v1117
    %v1119 = vand.u32 %v115, 4294901760
    %v1120 = vsub.f32 %v115, %v1119
    %v1121 = vand.u32 %v1120, 4294901760
    %1122 = vmatpush.msra.mxu0 %v1121
    %v1123 = vand.u32 %v114, 4294901760
    %v1124 = vsub.f32 %v114, %v1123
    %v1125 = vand.u32 %v1124, 4294901760
    %1126 = vmatpush.msra.mxu0 %v1125
    %v1127 = vand.u32 %v80, 4294901760
    %1128 = vmatmul.f32.gmra.mxu0 %v1127
    %v1129 = vpop.f32.mrf.mxu0
    %v1130 = vadd.f32 %v1061, %v1129
    %1131 = vdwg.mxu0
    %v1132 = vand.u32 %v129, 4294901760
    %1133 = vmatpush.msra.mxu0 %v1132
    %v1134 = vand.u32 %v128, 4294901760
    %1135 = vmatpush.msra.mxu0 %v1134
    %v1136 = vand.u32 %v127, 4294901760
    %1137 = vmatpush.msra.mxu0 %v1136
    %v1138 = vand.u32 %v126, 4294901760
    %1139 = vmatpush.msra.mxu0 %v1138
    %v1140 = vand.u32 %v125, 4294901760
    %1141 = vmatpush.msra.mxu0 %v1140
    %v1142 = vand.u32 %v124, 4294901760
    %1143 = vmatpush.msra.mxu0 %v1142
    %v1144 = vand.u32 %v123, 4294901760
    %1145 = vmatpush.msra.mxu0 %v1144
    %v1146 = vand.u32 %v122, 4294901760
    %1147 = vmatpush.msra.mxu0 %v1146
    %v1148 = vand.u32 %v121, 4294901760
    %1149 = vmatpush.msra.mxu0 %v1148
    %v1150 = vand.u32 %v120, 4294901760
    %1151 = vmatpush.msra.mxu0 %v1150
    %v1152 = vand.u32 %v119, 4294901760
    %1153 = vmatpush.msra.mxu0 %v1152
    %v1154 = vand.u32 %v118, 4294901760
    %1155 = vmatpush.msra.mxu0 %v1154
    %v1156 = vand.u32 %v117, 4294901760
    %1157 = vmatpush.msra.mxu0 %v1156
    %v1158 = vand.u32 %v116, 4294901760
    %1159 = vmatpush.msra.mxu0 %v1158
    %v1160 = vand.u32 %v115, 4294901760
    %1161 = vmatpush.msra.mxu0 %v1160
    %v1162 = vand.u32 %v114, 4294901760
    %1163 = vmatpush.msra.mxu0 %v1162
    %v1164 = vand.u32 %v80, 4294901760
    %1165 = vmatmul.f32.gmra.mxu0 %v1164
    %v1166 = vpop.f32.mrf.mxu0
    %v1167 = vadd.f32 %v1130, %v1166
    %1168 = vdwg.mxu0
    %v1169 = vand.u32 %v145, 4294901760
    %1170 = vmatpush.msra.mxu0 %v1169
    %v1171 = vand.u32 %v144, 4294901760
    %1172 = vmatpush.msra.mxu0 %v1171
    %v1173 = vand.u32 %v143, 4294901760
    %1174 = vmatpush.msra.mxu0 %v1173
    %v1175 = vand.u32 %v142, 4294901760
    %1176 = vmatpush.msra.mxu0 %v1175
    %v1177 = vand.u32 %v141, 4294901760
    %1178 = vmatpush.msra.mxu0 %v1177
    %v1179 = vand.u32 %v140, 4294901760
    %1180 = vmatpush.msra.mxu0 %v1179
    %v1181 = vand.u32 %v139, 4294901760
    %1182 = vmatpush.msra.mxu0 %v1181
    %v1183 = vand.u32 %v138, 4294901760
    %1184 = vmatpush.msra.mxu0 %v1183
    %v1185 = vand.u32 %v137, 4294901760
    %1186 = vmatpush.msra.mxu0 %v1185
    %v1187 = vand.u32 %v136, 4294901760
    %1188 = vmatpush.msra.mxu0 %v1187
    %v1189 = vand.u32 %v135, 4294901760
    %1190 = vmatpush.msra.mxu0 %v1189
    %v1191 = vand.u32 %v134, 4294901760
    %1192 = vmatpush.msra.mxu0 %v1191
    %v1193 = vand.u32 %v133, 4294901760
    %1194 = vmatpush.msra.mxu0 %v1193
    %v1195 = vand.u32 %v132, 4294901760
    %1196 = vmatpush.msra.mxu0 %v1195
    %v1197 = vand.u32 %v131, 4294901760
    %1198 = vmatpush.msra.mxu0 %v1197
    %v1199 = vand.u32 %v130, 4294901760
    %1200 = vmatpush.msra.mxu0 %v1199
    %v1201 = vand.u32 %v81, 4294901760
    %v1202 = vsub.f32 %v81, %v1201
    %v1203 = vand.u32 %v1202, 4294901760
    %v1204 = vsub.f32 %v1202, %v1203
    %v1205 = vand.u32 %v1204, 4294901760
    %1206 = vmatmul.f32.gmra.mxu0 %v1205
    %v1207 = vpop.f32.mrf.mxu0
    %v1208 = vadd.f32 %v1167, %v1207
    %1209 = vdwg.mxu0
    %v1210 = vand.u32 %v145, 4294901760
    %v1211 = vsub.f32 %v145, %v1210
    %v1212 = vand.u32 %v1211, 4294901760
    %v1213 = vsub.f32 %v1211, %v1212
    %v1214 = vand.u32 %v1213, 4294901760
    %1215 = vmatpush.msra.mxu0 %v1214
    %v1216 = vand.u32 %v144, 4294901760
    %v1217 = vsub.f32 %v144, %v1216
    %v1218 = vand.u32 %v1217, 4294901760
    %v1219 = vsub.f32 %v1217, %v1218
    %v1220 = vand.u32 %v1219, 4294901760
    %1221 = vmatpush.msra.mxu0 %v1220
    %v1222 = vand.u32 %v143, 4294901760
    %v1223 = vsub.f32 %v143, %v1222
    %v1224 = vand.u32 %v1223, 4294901760
    %v1225 = vsub.f32 %v1223, %v1224
    %v1226 = vand.u32 %v1225, 4294901760
    %1227 = vmatpush.msra.mxu0 %v1226
    %v1228 = vand.u32 %v142, 4294901760
    %v1229 = vsub.f32 %v142, %v1228
    %v1230 = vand.u32 %v1229, 4294901760
    %v1231 = vsub.f32 %v1229, %v1230
    %v1232 = vand.u32 %v1231, 4294901760
    %1233 = vmatpush.msra.mxu0 %v1232
    %v1234 = vand.u32 %v141, 4294901760
    %v1235 = vsub.f32 %v141, %v1234
    %v1236 = vand.u32 %v1235, 4294901760
    %v1237 = vsub.f32 %v1235, %v1236
    %v1238 = vand.u32 %v1237, 4294901760
    %1239 = vmatpush.msra.mxu0 %v1238
    %v1240 = vand.u32 %v140, 4294901760
    %v1241 = vsub.f32 %v140, %v1240
    %v1242 = vand.u32 %v1241, 4294901760
    %v1243 = vsub.f32 %v1241, %v1242
    %v1244 = vand.u32 %v1243, 4294901760
    %1245 = vmatpush.msra.mxu0 %v1244
    %v1246 = vand.u32 %v139, 4294901760
    %v1247 = vsub.f32 %v139, %v1246
    %v1248 = vand.u32 %v1247, 4294901760
    %v1249 = vsub.f32 %v1247, %v1248
    %v1250 = vand.u32 %v1249, 4294901760
    %1251 = vmatpush.msra.mxu0 %v1250
    %v1252 = vand.u32 %v138, 4294901760
    %v1253 = vsub.f32 %v138, %v1252
    %v1254 = vand.u32 %v1253, 4294901760
    %v1255 = vsub.f32 %v1253, %v1254
    %v1256 = vand.u32 %v1255, 4294901760
    %1257 = vmatpush.msra.mxu0 %v1256
    %v1258 = vand.u32 %v137, 4294901760
    %v1259 = vsub.f32 %v137, %v1258
    %v1260 = vand.u32 %v1259, 4294901760
    %v1261 = vsub.f32 %v1259, %v1260
    %v1262 = vand.u32 %v1261, 4294901760
    %1263 = vmatpush.msra.mxu0 %v1262
    %v1264 = vand.u32 %v136, 4294901760
    %v1265 = vsub.f32 %v136, %v1264
    %v1266 = vand.u32 %v1265, 4294901760
    %v1267 = vsub.f32 %v1265, %v1266
    %v1268 = vand.u32 %v1267, 4294901760
    %1269 = vmatpush.msra.mxu0 %v1268
    %v1270 = vand.u32 %v135, 4294901760
    %v1271 = vsub.f32 %v135, %v1270
    %v1272 = vand.u32 %v1271, 4294901760
    %v1273 = vsub.f32 %v1271, %v1272
    %v1274 = vand.u32 %v1273, 4294901760
    %1275 = vmatpush.msra.mxu0 %v1274
    %v1276 = vand.u32 %v134, 4294901760
    %v1277 = vsub.f32 %v134, %v1276
    %v1278 = vand.u32 %v1277, 4294901760
    %v1279 = vsub.f32 %v1277, %v1278
    %v1280 = vand.u32 %v1279, 4294901760
    %1281 = vmatpush.msra.mxu0 %v1280
    %v1282 = vand.u32 %v133, 4294901760
    %v1283 = vsub.f32 %v133, %v1282
    %v1284 = vand.u32 %v1283, 4294901760
    %v1285 = vsub.f32 %v1283, %v1284
    %v1286 = vand.u32 %v1285, 4294901760
    %1287 = vmatpush.msra.mxu0 %v1286
    %v1288 = vand.u32 %v132, 4294901760
    %v1289 = vsub.f32 %v132, %v1288
    %v1290 = vand.u32 %v1289, 4294901760
    %v1291 = vsub.f32 %v1289, %v1290
    %v1292 = vand.u32 %v1291, 4294901760
    %1293 = vmatpush.msra.mxu0 %v1292
    %v1294 = vand.u32 %v131, 4294901760
    %v1295 = vsub.f32 %v131, %v1294
    %v1296 = vand.u32 %v1295, 4294901760
    %v1297 = vsub.f32 %v1295, %v1296
    %v1298 = vand.u32 %v1297, 4294901760
    %1299 = vmatpush.msra.mxu0 %v1298
    %v1300 = vand.u32 %v130, 4294901760
    %v1301 = vsub.f32 %v130, %v1300
    %v1302 = vand.u32 %v1301, 4294901760
    %v1303 = vsub.f32 %v1301, %v1302
    %v1304 = vand.u32 %v1303, 4294901760
    %1305 = vmatpush.msra.mxu0 %v1304
    %v1306 = vand.u32 %v81, 4294901760
    %1307 = vmatmul.f32.gmra.mxu0 %v1306
    %v1308 = vpop.f32.mrf.mxu0
    %v1309 = vadd.f32 %v1208, %v1308
    %1310 = vdwg.mxu0
    %v1311 = vand.u32 %v145, 4294901760
    %v1312 = vsub.f32 %v145, %v1311
    %1313 = vmatpush.msra.mxu0 %v1312
    %v1314 = vand.u32 %v144, 4294901760
    %v1315 = vsub.f32 %v144, %v1314
    %1316 = vmatpush.msra.mxu0 %v1315
    %v1317 = vand.u32 %v143, 4294901760
    %v1318 = vsub.f32 %v143, %v1317
    %1319 = vmatpush.msra.mxu0 %v1318
    %v1320 = vand.u32 %v142, 4294901760
    %v1321 = vsub.f32 %v142, %v1320
    %1322 = vmatpush.msra.mxu0 %v1321
    %v1323 = vand.u32 %v141, 4294901760
    %v1324 = vsub.f32 %v141, %v1323
    %1325 = vmatpush.msra.mxu0 %v1324
    %v1326 = vand.u32 %v140, 4294901760
    %v1327 = vsub.f32 %v140, %v1326
    %1328 = vmatpush.msra.mxu0 %v1327
    %v1329 = vand.u32 %v139, 4294901760
    %v1330 = vsub.f32 %v139, %v1329
    %1331 = vmatpush.msra.mxu0 %v1330
    %v1332 = vand.u32 %v138, 4294901760
    %v1333 = vsub.f32 %v138, %v1332
    %1334 = vmatpush.msra.mxu0 %v1333
    %v1335 = vand.u32 %v137, 4294901760
    %v1336 = vsub.f32 %v137, %v1335
    %1337 = vmatpush.msra.mxu0 %v1336
    %v1338 = vand.u32 %v136, 4294901760
    %v1339 = vsub.f32 %v136, %v1338
    %1340 = vmatpush.msra.mxu0 %v1339
    %v1341 = vand.u32 %v135, 4294901760
    %v1342 = vsub.f32 %v135, %v1341
    %1343 = vmatpush.msra.mxu0 %v1342
    %v1344 = vand.u32 %v134, 4294901760
    %v1345 = vsub.f32 %v134, %v1344
    %1346 = vmatpush.msra.mxu0 %v1345
    %v1347 = vand.u32 %v133, 4294901760
    %v1348 = vsub.f32 %v133, %v1347
    %1349 = vmatpush.msra.mxu0 %v1348
    %v1350 = vand.u32 %v132, 4294901760
    %v1351 = vsub.f32 %v132, %v1350
    %1352 = vmatpush.msra.mxu0 %v1351
    %v1353 = vand.u32 %v131, 4294901760
    %v1354 = vsub.f32 %v131, %v1353
    %1355 = vmatpush.msra.mxu0 %v1354
    %v1356 = vand.u32 %v130, 4294901760
    %v1357 = vsub.f32 %v130, %v1356
    %1358 = vmatpush.msra.mxu0 %v1357
    %v1359 = vand.u32 %v81, 4294901760
    %v1360 = vsub.f32 %v81, %v1359
    %1361 = vmatmul.f32.gmra.mxu0 %v1360
    %v1362 = vpop.f32.mrf.mxu0
    %v1363 = vadd.f32 %v1309, %v1362
    %1364 = vdwg.mxu0
    %v1365 = vand.u32 %v145, 4294901760
    %1366 = vmatpush.msra.mxu0 %v1365
    %v1367 = vand.u32 %v144, 4294901760
    %1368 = vmatpush.msra.mxu0 %v1367
    %v1369 = vand.u32 %v143, 4294901760
    %1370 = vmatpush.msra.mxu0 %v1369
    %v1371 = vand.u32 %v142, 4294901760
    %1372 = vmatpush.msra.mxu0 %v1371
    %v1373 = vand.u32 %v141, 4294901760
    %1374 = vmatpush.msra.mxu0 %v1373
    %v1375 = vand.u32 %v140, 4294901760
    %1376 = vmatpush.msra.mxu0 %v1375
    %v1377 = vand.u32 %v139, 4294901760
    %1378 = vmatpush.msra.mxu0 %v1377
    %v1379 = vand.u32 %v138, 4294901760
    %1380 = vmatpush.msra.mxu0 %v1379
    %v1381 = vand.u32 %v137, 4294901760
    %1382 = vmatpush.msra.mxu0 %v1381
    %v1383 = vand.u32 %v136, 4294901760
    %1384 = vmatpush.msra.mxu0 %v1383
    %v1385 = vand.u32 %v135, 4294901760
    %1386 = vmatpush.msra.mxu0 %v1385
    %v1387 = vand.u32 %v134, 4294901760
    %1388 = vmatpush.msra.mxu0 %v1387
    %v1389 = vand.u32 %v133, 4294901760
    %1390 = vmatpush.msra.mxu0 %v1389
    %v1391 = vand.u32 %v132, 4294901760
    %1392 = vmatpush.msra.mxu0 %v1391
    %v1393 = vand.u32 %v131, 4294901760
    %1394 = vmatpush.msra.mxu0 %v1393
    %v1395 = vand.u32 %v130, 4294901760
    %1396 = vmatpush.msra.mxu0 %v1395
    %v1397 = vand.u32 %v81, 4294901760
    %v1398 = vsub.f32 %v81, %v1397
    %v1399 = vand.u32 %v1398, 4294901760
    %1400 = vmatmul.f32.gmra.mxu0 %v1399
    %v1401 = vpop.f32.mrf.mxu0
    %v1402 = vadd.f32 %v1363, %v1401
    %1403 = vdwg.mxu0
    %v1404 = vand.u32 %v145, 4294901760
    %v1405 = vsub.f32 %v145, %v1404
    %v1406 = vand.u32 %v1405, 4294901760
    %1407 = vmatpush.msra.mxu0 %v1406
    %v1408 = vand.u32 %v144, 4294901760
    %v1409 = vsub.f32 %v144, %v1408
    %v1410 = vand.u32 %v1409, 4294901760
    %1411 = vmatpush.msra.mxu0 %v1410
    %v1412 = vand.u32 %v143, 4294901760
    %v1413 = vsub.f32 %v143, %v1412
    %v1414 = vand.u32 %v1413, 4294901760
    %1415 = vmatpush.msra.mxu0 %v1414
    %v1416 = vand.u32 %v142, 4294901760
    %v1417 = vsub.f32 %v142, %v1416
    %v1418 = vand.u32 %v1417, 4294901760
    %1419 = vmatpush.msra.mxu0 %v1418
    %v1420 = vand.u32 %v141, 4294901760
    %v1421 = vsub.f32 %v141, %v1420
    %v1422 = vand.u32 %v1421, 4294901760
    %1423 = vmatpush.msra.mxu0 %v1422
    %v1424 = vand.u32 %v140, 4294901760
    %v1425 = vsub.f32 %v140, %v1424
    %v1426 = vand.u32 %v1425, 4294901760
    %1427 = vmatpush.msra.mxu0 %v1426
    %v1428 = vand.u32 %v139, 4294901760
    %v1429 = vsub.f32 %v139, %v1428
    %v1430 = vand.u32 %v1429, 4294901760
    %1431 = vmatpush.msra.mxu0 %v1430
    %v1432 = vand.u32 %v138, 4294901760
    %v1433 = vsub.f32 %v138, %v1432
    %v1434 = vand.u32 %v1433, 4294901760
    %1435 = vmatpush.msra.mxu0 %v1434
    %v1436 = vand.u32 %v137, 4294901760
    %v1437 = vsub.f32 %v137, %v1436
    %v1438 = vand.u32 %v1437, 4294901760
    %1439 = vmatpush.msra.mxu0 %v1438
    %v1440 = vand.u32 %v136, 4294901760
    %v1441 = vsub.f32 %v136, %v1440
    %v1442 = vand.u32 %v1441, 4294901760
    %1443 = vmatpush.msra.mxu0 %v1442
    %v1444 = vand.u32 %v135, 4294901760
    %v1445 = vsub.f32 %v135, %v1444
    %v1446 = vand.u32 %v1445, 4294901760
    %1447 = vmatpush.msra.mxu0 %v1446
    %v1448 = vand.u32 %v134, 4294901760
    %v1449 = vsub.f32 %v134, %v1448
    %v1450 = vand.u32 %v1449, 4294901760
    %1451 = vmatpush.msra.mxu0 %v1450
    %v1452 = vand.u32 %v133, 4294901760
    %v1453 = vsub.f32 %v133, %v1452
    %v1454 = vand.u32 %v1453, 4294901760
    %1455 = vmatpush.msra.mxu0 %v1454
    %v1456 = vand.u32 %v132, 4294901760
    %v1457 = vsub.f32 %v132, %v1456
    %v1458 = vand.u32 %v1457, 4294901760
    %1459 = vmatpush.msra.mxu0 %v1458
    %v1460 = vand.u32 %v131, 4294901760
    %v1461 = vsub.f32 %v131, %v1460
    %v1462 = vand.u32 %v1461, 4294901760
    %1463 = vmatpush.msra.mxu0 %v1462
    %v1464 = vand.u32 %v130, 4294901760
    %v1465 = vsub.f32 %v130, %v1464
    %v1466 = vand.u32 %v1465, 4294901760
    %1467 = vmatpush.msra.mxu0 %v1466
    %v1468 = vand.u32 %v81, 4294901760
    %1469 = vmatmul.f32.gmra.mxu0 %v1468
    %v1470 = vpop.f32.mrf.mxu0
    %v1471 = vadd.f32 %v1402, %v1470
    %1472 = vdwg.mxu0
    %v1473 = vand.u32 %v145, 4294901760
    %1474 = vmatpush.msra.mxu0 %v1473
    %v1475 = vand.u32 %v144, 4294901760
    %1476 = vmatpush.msra.mxu0 %v1475
    %v1477 = vand.u32 %v143, 4294901760
    %1478 = vmatpush.msra.mxu0 %v1477
    %v1479 = vand.u32 %v142, 4294901760
    %1480 = vmatpush.msra.mxu0 %v1479
    %v1481 = vand.u32 %v141, 4294901760
    %1482 = vmatpush.msra.mxu0 %v1481
    %v1483 = vand.u32 %v140, 4294901760
    %1484 = vmatpush.msra.mxu0 %v1483
    %v1485 = vand.u32 %v139, 4294901760
    %1486 = vmatpush.msra.mxu0 %v1485
    %v1487 = vand.u32 %v138, 4294901760
    %1488 = vmatpush.msra.mxu0 %v1487
    %v1489 = vand.u32 %v137, 4294901760
    %1490 = vmatpush.msra.mxu0 %v1489
    %v1491 = vand.u32 %v136, 4294901760
    %1492 = vmatpush.msra.mxu0 %v1491
    %v1493 = vand.u32 %v135, 4294901760
    %1494 = vmatpush.msra.mxu0 %v1493
    %v1495 = vand.u32 %v134, 4294901760
    %1496 = vmatpush.msra.mxu0 %v1495
    %v1497 = vand.u32 %v133, 4294901760
    %1498 = vmatpush.msra.mxu0 %v1497
    %v1499 = vand.u32 %v132, 4294901760
    %1500 = vmatpush.msra.mxu0 %v1499
    %v1501 = vand.u32 %v131, 4294901760
    %1502 = vmatpush.msra.mxu0 %v1501
    %v1503 = vand.u32 %v130, 4294901760
    %1504 = vmatpush.msra.mxu0 %v1503
    %v1505 = vand.u32 %v81, 4294901760
    %1506 = vmatmul.f32.gmra.mxu0 %v1505
    %v1507 = vpop.f32.mrf.mxu0
    %v1508 = vadd.f32 %v1471, %v1507
    %1509 = vdwg.mxu0
    %1510 = vst [vmem:[#allocation5] sm:$0xff] %v1508
    // Predicated region
    $region14: #{tpu_custom_call.1} parent=1 // pred_check
      _
    $region15: #{tpu_custom_call.1} parent=1 // pred_check_branch
      %1512 = sbr.rel (0) target = $region17
    $region16: #{tpu_custom_call.1} parent=1 // pred_region
      %1514 = vsyncadd [#allocation4], 0
      %s1516 = sshll.u32 [#allocation5], 4
      %s1517 = int_to_ptr.vmem [resolvable:$true] %s1516
      %s1518 = sshll.u32 %s2, 4
      %s1519 = int_to_ptr.hbm [resolvable:$true] %s1518
      %1521 = dma.vmem_to_hbm [thread:$0]  %s1517, 128, %s1519, [#allocation4]
    $region17: #{tpu_custom_call.1} parent=1 // pred_fallthru
      _
    // Predicated region
    $region18: #{tpu_custom_call.1} parent=1 // pred_check
      _
    $region19: #{tpu_custom_call.1} parent=1 // pred_check_branch
      %1523 = sbr.rel (0) target = $region21
    $region20: #{tpu_custom_call.1} parent=1 // pred_region
      %1525 = dma.done [#allocation4], 128
    $region21: #{tpu_custom_call.1} parent=1 // pred_fallthru
      _
    %1526 = vsyncpa [#allocation3], 1
    %1527 = vsyncpa [#allocation4], 1

</llo_original>
